<compile_context>
chip_gen: v5e
topology: v5e:2x2
jax: 0.10.0
libtpu: 0.0.40
codegen_flags: <defaults>
</compile_context>

<pallas_src>
import functools

import jax
import jax.numpy as jnp
from jax import lax
from jax.experimental import pallas as pl
from jax.experimental.pallas import tpu as pltpu

EPS = 1e-5          # nn.BatchNorm1d default eps
HEAD1, HEAD2 = 128, 256   # arc_num == 1 head widths


def _round_up(n, m):
    return ((n + m - 1) // m) * m


def _layout(F, H):
    """Row offsets of every parameter inside the two packed VMEM slabs.

    Every segment starts on an 8-row (sublane-tile) boundary so no in-kernel slice is
    sublane-misaligned.  slab0 is 4H(=128) lanes wide, slab1 is HEAD2(=256) lanes wide.
    """
    FP, HP = _round_up(F, 8), _round_up(H, 8)
    o = {"FP": FP, "HP": HP}
    r = 0
    o["t2vw"] = r; r += FP        # t2v sin weights (lane-padded to 4H)
    o["bm"] = r;   r += FP        # folded weight: x -> gate pre-activations
    o["a"] = r;    r += 4 * H     # folded weight: sin(features) -> gate pre-activations
    o["whh"] = r;  r += HP        # recurrent weight (gate-prescaled)
    o["w1"] = r;   r += HP        # head layer1 weight
    o["t2vb"] = r; r += 8         # t2v sin bias
    o["gxb"] = r;  r += 8         # folded total gate bias
    o["b1"] = r;   r += 8
    o["g1"] = r;   r += 8
    o["be1"] = r;  r += 8
    o["rows0"] = r
    r = 0
    o["w2"] = r;   r += HEAD1
    o["b2"] = r;   r += 8
    o["g2"] = r;   r += 8
    o["be2"] = r;  r += 8
    o["w3t"] = r;  r += 8         # layer3 weight stored transposed (1, HEAD2)
    o["b3"] = r;   r += 8         # layer3 bias / HEAD2, broadcast over the row
    o["rows1"] = r
    return o


def _lstm_model_kernel(x_ref, p0_ref, p1_ref, out_ref, *, T, B, H, o):
    f32 = jnp.float32
    FP = o["FP"]

    # All matmuls: f32 operands, DEFAULT precision (single bf16 MXU pass with f32
    # accumulation).  No HIGHEST 6-pass decomposition, no in-kernel .astype casts.
    def mm(a, b):
        return jnp.dot(a, b, preferred_element_type=f32)

    x = x_ref[...]                                                  # (T*B, FP)

    # ---- folded input path: gate pre-activations for ALL timesteps in 3 matmuls ----
    s = jnp.sin(mm(x, p0_ref[o["t2vw"]:o["t2vw"] + FP, :])
                + p0_ref[o["t2vb"]:o["t2vb"] + 1, :])               # (T*B, 4H); pad lanes = sin(0) = 0
    gx = (mm(s, p0_ref[o["a"]:o["a"] + 4 * H, :])                   # zero rows kill padded lanes
          + mm(x, p0_ref[o["bm"]:o["bm"] + FP, :])
          + p0_ref[o["gxb"]:o["gxb"] + 1, :])                       # (T*B, 4H)

    whh = p0_ref[o["whh"]:o["whh"] + H, :]                          # hoisted invariant load
    # Note: the (H,4H) recurrent weight fits the MXU staging registers; if a bundle dump
    # shows it being re-pushed every step, drive it explicitly with
    # pltpu.matmul_push_rhs / matmul_acc_lhs / matmul_pop.

    # ---- recurrence: one tiny (B,H)x(H,4H) matmul + elementwise per step ----
    # PyTorch gate order i, f, g, o.  The i/f/o columns of whh/A/Bm/bias were pre-scaled
    # by 1/2 host-side, so sigmoid(a) == 0.5*(tanh(a/2)+1) falls out of one full-width
    # tanh (single EUP pass per step).  T is static -> full Python unroll.
    h = jnp.zeros((B, H), f32)
    c = jnp.zeros((B, H), f32)
    for t in range(T):
        g = gx[t * B:(t + 1) * B, :] + mm(h, whh)                   # (B, 4H)
        tg = jnp.tanh(g)
        sg = 0.5 * (tg + 1.0)
        # 4H == 128 keeps the gates in one vreg; the 32-lane extracts below are XLU ops
        # off the MXU/VPU slots (a pltpu.roll-based full-width update is possible but
        # keeps the same number of cross-lane moves on the serial chain).
        c = sg[:, H:2 * H] * c + sg[:, 0:H] * tg[:, 2 * H:3 * H]
        h = sg[:, 3 * H:4 * H] * jnp.tanh(c)

    # ---- MLP head (arc_num == 1), training-mode BatchNorm (batch stats, biased var) ----
    def batchnorm(y, gamma, beta):
        mu = jnp.mean(y, axis=0, keepdims=True)
        var = jnp.mean((y - mu) * (y - mu), axis=0, keepdims=True)
        return (y - mu) * lax.rsqrt(var + EPS) * gamma + beta

    y = mm(h, p0_ref[o["w1"]:o["w1"] + H, :]) + p0_ref[o["b1"]:o["b1"] + 1, :]
    y = batchnorm(y, p0_ref[o["g1"]:o["g1"] + 1, :], p0_ref[o["be1"]:o["be1"] + 1, :])
    y = mm(y, p1_ref[o["w2"]:o["w2"] + HEAD1, :]) + p1_ref[o["b2"]:o["b2"] + 1, :]
    y = batchnorm(y, p1_ref[o["g2"]:o["g2"] + 1, :], p1_ref[o["be2"]:o["be2"] + 1, :])
    # layer3 (HEAD2 -> 1) as a lane reduction: w3 stored transposed and b3 pre-divided by
    # HEAD2 and broadcast, so the bias rides along inside the same reduction.
    out_ref[...] = jnp.sum(y * p1_ref[o["w3t"]:o["w3t"] + 1, :]
                           + p1_ref[o["b3"]:o["b3"] + 1, :],
                           axis=-1, keepdims=True)


def _gate_scale(H):
    # Fold the 1/2 of sigmoid(a) = 0.5*(tanh(a/2)+1) into the i/f/o gate columns
    # (gate order: i, f, g, o).  Exact in every float format (power of two).
    return jnp.concatenate([jnp.full((2 * H,), 0.5, jnp.float32),
                            jnp.ones((H,), jnp.float32),
                            jnp.full((H,), 0.5, jnp.float32)])


def _fold_input_chain(p, wih, bl):
    """gx = sin(x@t2v_w + t2v_b) @ A + x @ Bm + bias_tot  (one-time host fold, full f32)."""
    hi = jax.lax.Precision.HIGHEST
    m15 = jnp.dot(p["l0_w"][:15, :], wih, precision=hi)          # (15, 4H)
    m1 = jnp.dot(p["l0_w"][15:16, :], wih, precision=hi)         # (1, 4H)
    A = m15
    Bm = jnp.dot(p["t2v_w0"], m1, precision=hi)                  # (F, 4H)
    bias_tot = (jnp.dot(p["t2v_b0"], m1, precision=hi)
                + jnp.dot(p["l0_b"], wih, precision=hi) + bl)    # (1, 4H)
    return A, Bm, bias_tot


def lstm_model_pallas(x, p):
    """Forward pass of LSTMmodel(use_t2v=True, use_dual_lstm=False, arc_num=1)."""
    if x.ndim < 3:
        x = x[:, None, :]                      # unsqueeze(1)
    B, T, F = x.shape
    H = p["whh"].shape[0]
    assert 4 * H == HEAD1 == 128, "packed-slab layout assumes 4*H == 128"
    o = _layout(F, H)
    FP, HP, W = o["FP"], o["HP"], 4 * H
    f32 = jnp.float32

    gs = _gate_scale(H)
    wih, whh, bl = p["wih"] * gs, p["whh"] * gs, p["b_lstm"] * gs
    A, Bm, bias_tot = _fold_input_chain(p, wih, bl)

    # ---- pack every parameter into two lane-aligned f32 slabs (2 parameter DMAs) ----
    def seg(a, rows, cols):
        a = a.astype(f32)
        return jnp.pad(a, ((0, rows - a.shape[0]), (0, cols - a.shape[1])))

    slab0 = jnp.concatenate([
        seg(p["t2v_w"], FP, W),            # t2vw  (cols 15.. zero)
        seg(Bm, FP, W),                    # bm
        seg(A, W, W),                      # a     (rows 15.. zero)
        seg(whh, HP, W),                   # whh
        seg(p["w1"], HP, W),               # w1
        seg(p["t2v_b"], 8, W),             # t2vb
        seg(bias_tot, 8, W),               # gxb
        seg(p["b1"], 8, W), seg(p["g1"], 8, W), seg(p["be1"], 8, W),
    ], axis=0)                             # (rows0, 128)
    slab1 = jnp.concatenate([
        seg(p["w2"], HEAD1, HEAD2),
        seg(p["b2"], 8, HEAD2), seg(p["g2"], 8, HEAD2), seg(p["be2"], 8, HEAD2),
        seg(p["w3"].T, 8, HEAD2),
        seg(jnp.broadcast_to(p["b3"] / HEAD2, (1, HEAD2)), 8, HEAD2),
    ], axis=0)                             # (rows1, 256)

    # Time-major rows (row = t*B + b): the unrolled recurrence then reads contiguous,
    # sublane-aligned (B, 4H) slabs of the precomputed gate projection.
    x_tm = seg(jnp.transpose(x, (1, 0, 2)).reshape(T * B, F), T * B, FP)

    kernel = functools.partial(_lstm_model_kernel, T=T, B=B, H=H, o=o)
    return pl.pallas_call(
        kernel,
        out_shape=jax.ShapeDtypeStruct((B, 1), f32),
        in_specs=[pl.BlockSpec(memory_space=pltpu.MemorySpace.VMEM)] * 3,
        out_specs=pl.BlockSpec(memory_space=pltpu.MemorySpace.VMEM),
    )(x_tm, slab0, slab1)


def reference_forward(x, p):
    """Pure-JAX reference mirroring the PyTorch forward structure (no host-side fold).
    Matmuls use bf16 operands with f32 accumulation, the same single-MXU-pass precision
    class as the kernel's DEFAULT-precision f32 dots."""
    if x.ndim < 3:
        x = x[:, None, :]
    B, T, F = x.shape
    H = p["whh"].shape[0]
    f32, bf16 = jnp.float32, jnp.bfloat16

    def mm(a, b):
        return jnp.dot(a.astype(bf16), b.astype(bf16), preferred_element_type=f32)

    x2 = x.reshape(B * T, F)
    v1 = jnp.sin(mm(x2, p["t2v_w"]) + p["t2v_b"])
    v2 = mm(x2, p["t2v_w0"]) + p["t2v_b0"]
    tv = jnp.concatenate([v1, v2], axis=-1)
    xin = mm(tv, p["l0_w"]) + p["l0_b"]
    gates_x = (mm(xin, p["wih"]) + p["b_lstm"]).reshape(B, T, 4 * H)

    def step(carry, gx_t):
        h, c = carry
        gates = gx_t + mm(h, p["whh"])
        i = jax.nn.sigmoid(gates[:, :H])
        f = jax.nn.sigmoid(gates[:, H:2 * H])
        g = jnp.tanh(gates[:, 2 * H:3 * H])
        og = jax.nn.sigmoid(gates[:, 3 * H:])
        c = f * c + i * g
        h = og * jnp.tanh(c)
        return (h, c), None

    init = (jnp.zeros((B, H), f32), jnp.zeros((B, H), f32))
    (h, _), _ = lax.scan(step, init, jnp.transpose(gates_x, (1, 0, 2)))

    def bn(y, g, be):
        mu = y.mean(0, keepdims=True)
        var = ((y - mu) ** 2).mean(0, keepdims=True)
        return (y - mu) * lax.rsqrt(var + EPS) * g + be

    y = mm(h, p["w1"]) + p["b1"]
    y = bn(y, p["g1"], p["be1"])
    y = mm(y, p["w2"]) + p["b2"]
    y = bn(y, p["g2"], p["be2"])
    return mm(y, p["w3"]) + p["b3"]


def init_params(key, input_size, hidden_size):
    F, H = input_size, hidden_size
    ks = jax.random.split(key, 16)
    n = lambda k, s, sc=1.0: (sc * jax.random.normal(k, s)).astype(jnp.float32)
    return {
        # SineActivation (torch.randn init)
        "t2v_w": n(ks[0], (F, 15)),
        "t2v_b": n(ks[1], (1, 15)),
        "t2v_w0": n(ks[2], (F, 1)),
        "t2v_b0": n(ks[3], (1, 1)),
        # layer0: Linear(16, F)  (stored transposed: in x out)
        "l0_w": n(ks[4], (16, F), 0.25),
        "l0_b": n(ks[5], (1, F), 0.25),
        # LSTM(F, H): W_ih (F,4H), W_hh (H,4H), combined bias (1,4H)
        "wih": n(ks[6], (F, 4 * H), 1.0 / jnp.sqrt(H)),
        "whh": n(ks[7], (H, 4 * H), 1.0 / jnp.sqrt(H)),
        "b_lstm": n(ks[8], (1, 4 * H), 1.0 / jnp.sqrt(H)),
        # head (arc_num == 1)
        "w1": n(ks[9], (H, 128), 1.0 / jnp.sqrt(H)),
        "b1": n(ks[10], (1, 128), 0.1),
        "g1": jnp.ones((1, 128), jnp.float32),
        "be1": jnp.zeros((1, 128), jnp.float32),
        "w2": n(ks[11], (128, 256), 1.0 / jnp.sqrt(128)),
        "b2": n(ks[12], (1, 256), 0.1),
        "g2": jnp.ones((1, 256), jnp.float32),
        "be2": jnp.zeros((1, 256), jnp.float32),
        "w3": n(ks[13], (256, 1), 1.0 / jnp.sqrt(256)),
        "b3": n(ks[14], (1, 1), 0.1),
    }


if __name__ == "__main__":
    # B=8 fills all 8 sublanes of a vreg and gives the training-mode BatchNorms
    # well-conditioned batch statistics.
    B, T, INPUT_SIZE, HIDDEN = 8, 8, 4, 32

    key = jax.random.PRNGKey(0)
    k_x, k_p = jax.random.split(key)
    x = jax.random.normal(k_x, (B, T, INPUT_SIZE), dtype=jnp.float32)
    params = init_params(k_p, INPUT_SIZE, HIDDEN)

    # --- check 1: the host-side algebraic fold of the input chain (full f32, tight) ---
    hi = jax.lax.Precision.HIGHEST
    x2 = x.reshape(B * T, INPUT_SIZE)
    A, Bm, bias_tot = _fold_input_chain(params, params["wih"], params["b_lstm"])
    v1 = jnp.sin(jnp.dot(x2, params["t2v_w"], precision=hi) + params["t2v_b"])
    v2 = jnp.dot(x2, params["t2v_w0"], precision=hi) + params["t2v_b0"]
    xin = jnp.dot(jnp.concatenate([v1, v2], -1), params["l0_w"], precision=hi) + params["l0_b"]
    gx_unfolded = jnp.dot(xin, params["wih"], precision=hi) + params["b_lstm"]
    gx_folded = (jnp.dot(v1, A, precision=hi) + jnp.dot(x2, Bm, precision=hi) + bias_tot)
    assert jnp.allclose(gx_folded, gx_unfolded, atol=1e-4, rtol=1e-4)

    # --- check 2: kernel vs. unfolded pure-JAX reference ---
    out = jax.block_until_ready(lstm_model_pallas(x, params))
    ref = jax.block_until_ready(reference_forward(x, params))
    assert out.shape == (B, 1), out.shape
    # Single-pass (bf16-operand) MXU matmuls plus two training-mode BatchNorms: the BN
    # batch statistics over 8 rows amplify the (decorrelated) low-precision rounding of
    # the folded vs. unfolded input path by ~1/batch_std, so agreement is at the
    # few-percent level (the fold itself is verified tightly in check 1 above).
    assert jnp.allclose(out, ref, atol=5e-2, rtol=5e-2), (out, ref)
    print("KERNEL_OK")
</pallas_src>

<mosaic_0001>
module attributes {stable_mosaic.version = 11 : i64} {
  func.func @_lstm_model_kernel(%arg0: memref<64x8xf32, #tpu.memory_space<vmem>>, %arg1: memref<248x128xf32, #tpu.memory_space<vmem>>, %arg2: memref<168x256xf32, #tpu.memory_space<vmem>>, %arg3: memref<8x1xf32, #tpu.memory_space<vmem>>) attributes {dimension_semantics = [], scalar_prefetch = 0 : i64, scratch_operands = 0 : i64, tpu.core_type = #tpu.core_type<tc>} {
    %c0 = arith.constant 0 : index
    %c0_0 = arith.constant 0 : index
    %0 = vector.load %arg0[%c0, %c0_0] : memref<64x8xf32, #tpu.memory_space<vmem>>, vector<64x8xf32>
    %c0_1 = arith.constant 0 : index
    %c0_2 = arith.constant 0 : index
    %1 = vector.load %arg1[%c0_1, %c0_2] : memref<248x128xf32, #tpu.memory_space<vmem>>, vector<8x128xf32>
    %cst = arith.constant dense<0.000000e+00> : vector<64x128xf32>
    %2 = tpu.matmul %0, %1, %cst {dimension_numbers = #tpu.dot_dimension_numbers<[1], [0], [0], [1], [0, 0, 1, 1], [], []>} : vector<64x8xf32>, vector<8x128xf32>, vector<64x128xf32> -> vector<64x128xf32>
    %c208 = arith.constant 208 : index
    %c0_3 = arith.constant 0 : index
    %3 = vector.load %arg1[%c208, %c0_3] : memref<248x128xf32, #tpu.memory_space<vmem>>, vector<1x128xf32>
    %4 = vector.broadcast %3 : vector<1x128xf32> to vector<64x128xf32>
    %5 = arith.addf %2, %4 : vector<64x128xf32>
    %6 = math.sin %5 : vector<64x128xf32>
    %c16 = arith.constant 16 : index
    %c0_4 = arith.constant 0 : index
    %7 = vector.load %arg1[%c16, %c0_4] : memref<248x128xf32, #tpu.memory_space<vmem>>, vector<128x128xf32>
    %cst_5 = arith.constant dense<0.000000e+00> : vector<64x128xf32>
    %8 = tpu.matmul %6, %7, %cst_5 {dimension_numbers = #tpu.dot_dimension_numbers<[1], [0], [0], [1], [0, 0, 1, 1], [], []>} : vector<64x128xf32>, vector<128x128xf32>, vector<64x128xf32> -> vector<64x128xf32>
    %c8 = arith.constant 8 : index
    %c0_6 = arith.constant 0 : index
    %9 = vector.load %arg1[%c8, %c0_6] : memref<248x128xf32, #tpu.memory_space<vmem>>, vector<8x128xf32>
    %cst_7 = arith.constant dense<0.000000e+00> : vector<64x128xf32>
    %10 = tpu.matmul %0, %9, %cst_7 {dimension_numbers = #tpu.dot_dimension_numbers<[1], [0], [0], [1], [0, 0, 1, 1], [], []>} : vector<64x8xf32>, vector<8x128xf32>, vector<64x128xf32> -> vector<64x128xf32>
    %11 = arith.addf %8, %10 : vector<64x128xf32>
    %c216 = arith.constant 216 : index
    %c0_8 = arith.constant 0 : index
    %12 = vector.load %arg1[%c216, %c0_8] : memref<248x128xf32, #tpu.memory_space<vmem>>, vector<1x128xf32>
    %13 = vector.broadcast %12 : vector<1x128xf32> to vector<64x128xf32>
    %14 = arith.addf %11, %13 : vector<64x128xf32>
    %c144 = arith.constant 144 : index
    %c0_9 = arith.constant 0 : index
    %15 = vector.load %arg1[%c144, %c0_9] : memref<248x128xf32, #tpu.memory_space<vmem>>, vector<32x128xf32>
    %cst_10 = arith.constant 0.000000e+00 : f32
    %16 = vector.broadcast %cst_10 : f32 to vector<8x32xf32>
    %cst_11 = arith.constant 0.000000e+00 : f32
    %17 = vector.broadcast %cst_11 : f32 to vector<8x32xf32>
    %18 = vector.extract_strided_slice %14 {offsets = [0, 0], sizes = [8, 128], strides = [1, 1]} : vector<64x128xf32> to vector<8x128xf32>
    %cst_12 = arith.constant dense<0.000000e+00> : vector<8x128xf32>
    %19 = tpu.matmul %16, %15, %cst_12 {dimension_numbers = #tpu.dot_dimension_numbers<[1], [0], [0], [1], [0, 0, 1, 1], [], []>} : vector<8x32xf32>, vector<32x128xf32>, vector<8x128xf32> -> vector<8x128xf32>
    %20 = arith.addf %18, %19 : vector<8x128xf32>
    %21 = math.tanh %20 : vector<8x128xf32>
    %cst_13 = arith.constant 1.000000e+00 : f32
    %22 = vector.broadcast %cst_13 : f32 to vector<8x128xf32>
    %23 = arith.addf %21, %22 : vector<8x128xf32>
    %cst_14 = arith.constant 5.000000e-01 : f32
    %24 = vector.broadcast %cst_14 : f32 to vector<8x128xf32>
    %25 = arith.mulf %24, %23 : vector<8x128xf32>
    %26 = vector.extract_strided_slice %25 {offsets = [0, 32], sizes = [8, 32], strides = [1, 1]} : vector<8x128xf32> to vector<8x32xf32>
    %27 = arith.mulf %26, %17 : vector<8x32xf32>
    %28 = vector.extract_strided_slice %25 {offsets = [0, 0], sizes = [8, 32], strides = [1, 1]} : vector<8x128xf32> to vector<8x32xf32>
    %29 = vector.extract_strided_slice %21 {offsets = [0, 64], sizes = [8, 32], strides = [1, 1]} : vector<8x128xf32> to vector<8x32xf32>
    %30 = arith.mulf %28, %29 : vector<8x32xf32>
    %31 = arith.addf %27, %30 : vector<8x32xf32>
    %32 = vector.extract_strided_slice %25 {offsets = [0, 96], sizes = [8, 32], strides = [1, 1]} : vector<8x128xf32> to vector<8x32xf32>
    %33 = math.tanh %31 : vector<8x32xf32>
    %34 = arith.mulf %32, %33 : vector<8x32xf32>
    %35 = vector.extract_strided_slice %14 {offsets = [8, 0], sizes = [8, 128], strides = [1, 1]} : vector<64x128xf32> to vector<8x128xf32>
    %cst_15 = arith.constant dense<0.000000e+00> : vector<8x128xf32>
    %36 = tpu.matmul %34, %15, %cst_15 {dimension_numbers = #tpu.dot_dimension_numbers<[1], [0], [0], [1], [0, 0, 1, 1], [], []>} : vector<8x32xf32>, vector<32x128xf32>, vector<8x128xf32> -> vector<8x128xf32>
    %37 = arith.addf %35, %36 : vector<8x128xf32>
    %38 = math.tanh %37 : vector<8x128xf32>
    %cst_16 = arith.constant 1.000000e+00 : f32
    %39 = vector.broadcast %cst_16 : f32 to vector<8x128xf32>
    %40 = arith.addf %38, %39 : vector<8x128xf32>
    %cst_17 = arith.constant 5.000000e-01 : f32
    %41 = vector.broadcast %cst_17 : f32 to vector<8x128xf32>
    %42 = arith.mulf %41, %40 : vector<8x128xf32>
    %43 = vector.extract_strided_slice %42 {offsets = [0, 32], sizes = [8, 32], strides = [1, 1]} : vector<8x128xf32> to vector<8x32xf32>
    %44 = arith.mulf %43, %31 : vector<8x32xf32>
    %45 = vector.extract_strided_slice %42 {offsets = [0, 0], sizes = [8, 32], strides = [1, 1]} : vector<8x128xf32> to vector<8x32xf32>
    %46 = vector.extract_strided_slice %38 {offsets = [0, 64], sizes = [8, 32], strides = [1, 1]} : vector<8x128xf32> to vector<8x32xf32>
    %47 = arith.mulf %45, %46 : vector<8x32xf32>
    %48 = arith.addf %44, %47 : vector<8x32xf32>
    %49 = vector.extract_strided_slice %42 {offsets = [0, 96], sizes = [8, 32], strides = [1, 1]} : vector<8x128xf32> to vector<8x32xf32>
    %50 = math.tanh %48 : vector<8x32xf32>
    %51 = arith.mulf %49, %50 : vector<8x32xf32>
    %52 = vector.extract_strided_slice %14 {offsets = [16, 0], sizes = [8, 128], strides = [1, 1]} : vector<64x128xf32> to vector<8x128xf32>
    %cst_18 = arith.constant dense<0.000000e+00> : vector<8x128xf32>
    %53 = tpu.matmul %51, %15, %cst_18 {dimension_numbers = #tpu.dot_dimension_numbers<[1], [0], [0], [1], [0, 0, 1, 1], [], []>} : vector<8x32xf32>, vector<32x128xf32>, vector<8x128xf32> -> vector<8x128xf32>
    %54 = arith.addf %52, %53 : vector<8x128xf32>
    %55 = math.tanh %54 : vector<8x128xf32>
    %cst_19 = arith.constant 1.000000e+00 : f32
    %56 = vector.broadcast %cst_19 : f32 to vector<8x128xf32>
    %57 = arith.addf %55, %56 : vector<8x128xf32>
    %cst_20 = arith.constant 5.000000e-01 : f32
    %58 = vector.broadcast %cst_20 : f32 to vector<8x128xf32>
    %59 = arith.mulf %58, %57 : vector<8x128xf32>
    %60 = vector.extract_strided_slice %59 {offsets = [0, 32], sizes = [8, 32], strides = [1, 1]} : vector<8x128xf32> to vector<8x32xf32>
    %61 = arith.mulf %60, %48 : vector<8x32xf32>
    %62 = vector.extract_strided_slice %59 {offsets = [0, 0], sizes = [8, 32], strides = [1, 1]} : vector<8x128xf32> to vector<8x32xf32>
    %63 = vector.extract_strided_slice %55 {offsets = [0, 64], sizes = [8, 32], strides = [1, 1]} : vector<8x128xf32> to vector<8x32xf32>
    %64 = arith.mulf %62, %63 : vector<8x32xf32>
    %65 = arith.addf %61, %64 : vector<8x32xf32>
    %66 = vector.extract_strided_slice %59 {offsets = [0, 96], sizes = [8, 32], strides = [1, 1]} : vector<8x128xf32> to vector<8x32xf32>
    %67 = math.tanh %65 : vector<8x32xf32>
    %68 = arith.mulf %66, %67 : vector<8x32xf32>
    %69 = vector.extract_strided_slice %14 {offsets = [24, 0], sizes = [8, 128], strides = [1, 1]} : vector<64x128xf32> to vector<8x128xf32>
    %cst_21 = arith.constant dense<0.000000e+00> : vector<8x128xf32>
    %70 = tpu.matmul %68, %15, %cst_21 {dimension_numbers = #tpu.dot_dimension_numbers<[1], [0], [0], [1], [0, 0, 1, 1], [], []>} : vector<8x32xf32>, vector<32x128xf32>, vector<8x128xf32> -> vector<8x128xf32>
    %71 = arith.addf %69, %70 : vector<8x128xf32>
    %72 = math.tanh %71 : vector<8x128xf32>
    %cst_22 = arith.constant 1.000000e+00 : f32
    %73 = vector.broadcast %cst_22 : f32 to vector<8x128xf32>
    %74 = arith.addf %72, %73 : vector<8x128xf32>
    %cst_23 = arith.constant 5.000000e-01 : f32
    %75 = vector.broadcast %cst_23 : f32 to vector<8x128xf32>
    %76 = arith.mulf %75, %74 : vector<8x128xf32>
    %77 = vector.extract_strided_slice %76 {offsets = [0, 32], sizes = [8, 32], strides = [1, 1]} : vector<8x128xf32> to vector<8x32xf32>
    %78 = arith.mulf %77, %65 : vector<8x32xf32>
    %79 = vector.extract_strided_slice %76 {offsets = [0, 0], sizes = [8, 32], strides = [1, 1]} : vector<8x128xf32> to vector<8x32xf32>
    %80 = vector.extract_strided_slice %72 {offsets = [0, 64], sizes = [8, 32], strides = [1, 1]} : vector<8x128xf32> to vector<8x32xf32>
    %81 = arith.mulf %79, %80 : vector<8x32xf32>
    %82 = arith.addf %78, %81 : vector<8x32xf32>
    %83 = vector.extract_strided_slice %76 {offsets = [0, 96], sizes = [8, 32], strides = [1, 1]} : vector<8x128xf32> to vector<8x32xf32>
    %84 = math.tanh %82 : vector<8x32xf32>
    %85 = arith.mulf %83, %84 : vector<8x32xf32>
    %86 = vector.extract_strided_slice %14 {offsets = [32, 0], sizes = [8, 128], strides = [1, 1]} : vector<64x128xf32> to vector<8x128xf32>
    %cst_24 = arith.constant dense<0.000000e+00> : vector<8x128xf32>
    %87 = tpu.matmul %85, %15, %cst_24 {dimension_numbers = #tpu.dot_dimension_numbers<[1], [0], [0], [1], [0, 0, 1, 1], [], []>} : vector<8x32xf32>, vector<32x128xf32>, vector<8x128xf32> -> vector<8x128xf32>
    %88 = arith.addf %86, %87 : vector<8x128xf32>
    %89 = math.tanh %88 : vector<8x128xf32>
    %cst_25 = arith.constant 1.000000e+00 : f32
    %90 = vector.broadcast %cst_25 : f32 to vector<8x128xf32>
    %91 = arith.addf %89, %90 : vector<8x128xf32>
    %cst_26 = arith.constant 5.000000e-01 : f32
    %92 = vector.broadcast %cst_26 : f32 to vector<8x128xf32>
    %93 = arith.mulf %92, %91 : vector<8x128xf32>
    %94 = vector.extract_strided_slice %93 {offsets = [0, 32], sizes = [8, 32], strides = [1, 1]} : vector<8x128xf32> to vector<8x32xf32>
    %95 = arith.mulf %94, %82 : vector<8x32xf32>
    %96 = vector.extract_strided_slice %93 {offsets = [0, 0], sizes = [8, 32], strides = [1, 1]} : vector<8x128xf32> to vector<8x32xf32>
    %97 = vector.extract_strided_slice %89 {offsets = [0, 64], sizes = [8, 32], strides = [1, 1]} : vector<8x128xf32> to vector<8x32xf32>
    %98 = arith.mulf %96, %97 : vector<8x32xf32>
    %99 = arith.addf %95, %98 : vector<8x32xf32>
    %100 = vector.extract_strided_slice %93 {offsets = [0, 96], sizes = [8, 32], strides = [1, 1]} : vector<8x128xf32> to vector<8x32xf32>
    %101 = math.tanh %99 : vector<8x32xf32>
    %102 = arith.mulf %100, %101 : vector<8x32xf32>
    %103 = vector.extract_strided_slice %14 {offsets = [40, 0], sizes = [8, 128], strides = [1, 1]} : vector<64x128xf32> to vector<8x128xf32>
    %cst_27 = arith.constant dense<0.000000e+00> : vector<8x128xf32>
    %104 = tpu.matmul %102, %15, %cst_27 {dimension_numbers = #tpu.dot_dimension_numbers<[1], [0], [0], [1], [0, 0, 1, 1], [], []>} : vector<8x32xf32>, vector<32x128xf32>, vector<8x128xf32> -> vector<8x128xf32>
    %105 = arith.addf %103, %104 : vector<8x128xf32>
    %106 = math.tanh %105 : vector<8x128xf32>
    %cst_28 = arith.constant 1.000000e+00 : f32
    %107 = vector.broadcast %cst_28 : f32 to vector<8x128xf32>
    %108 = arith.addf %106, %107 : vector<8x128xf32>
    %cst_29 = arith.constant 5.000000e-01 : f32
    %109 = vector.broadcast %cst_29 : f32 to vector<8x128xf32>
    %110 = arith.mulf %109, %108 : vector<8x128xf32>
    %111 = vector.extract_strided_slice %110 {offsets = [0, 32], sizes = [8, 32], strides = [1, 1]} : vector<8x128xf32> to vector<8x32xf32>
    %112 = arith.mulf %111, %99 : vector<8x32xf32>
    %113 = vector.extract_strided_slice %110 {offsets = [0, 0], sizes = [8, 32], strides = [1, 1]} : vector<8x128xf32> to vector<8x32xf32>
    %114 = vector.extract_strided_slice %106 {offsets = [0, 64], sizes = [8, 32], strides = [1, 1]} : vector<8x128xf32> to vector<8x32xf32>
    %115 = arith.mulf %113, %114 : vector<8x32xf32>
    %116 = arith.addf %112, %115 : vector<8x32xf32>
    %117 = vector.extract_strided_slice %110 {offsets = [0, 96], sizes = [8, 32], strides = [1, 1]} : vector<8x128xf32> to vector<8x32xf32>
    %118 = math.tanh %116 : vector<8x32xf32>
    %119 = arith.mulf %117, %118 : vector<8x32xf32>
    %120 = vector.extract_strided_slice %14 {offsets = [48, 0], sizes = [8, 128], strides = [1, 1]} : vector<64x128xf32> to vector<8x128xf32>
    %cst_30 = arith.constant dense<0.000000e+00> : vector<8x128xf32>
    %121 = tpu.matmul %119, %15, %cst_30 {dimension_numbers = #tpu.dot_dimension_numbers<[1], [0], [0], [1], [0, 0, 1, 1], [], []>} : vector<8x32xf32>, vector<32x128xf32>, vector<8x128xf32> -> vector<8x128xf32>
    %122 = arith.addf %120, %121 : vector<8x128xf32>
    %123 = math.tanh %122 : vector<8x128xf32>
    %cst_31 = arith.constant 1.000000e+00 : f32
    %124 = vector.broadcast %cst_31 : f32 to vector<8x128xf32>
    %125 = arith.addf %123, %124 : vector<8x128xf32>
    %cst_32 = arith.constant 5.000000e-01 : f32
    %126 = vector.broadcast %cst_32 : f32 to vector<8x128xf32>
    %127 = arith.mulf %126, %125 : vector<8x128xf32>
    %128 = vector.extract_strided_slice %127 {offsets = [0, 32], sizes = [8, 32], strides = [1, 1]} : vector<8x128xf32> to vector<8x32xf32>
    %129 = arith.mulf %128, %116 : vector<8x32xf32>
    %130 = vector.extract_strided_slice %127 {offsets = [0, 0], sizes = [8, 32], strides = [1, 1]} : vector<8x128xf32> to vector<8x32xf32>
    %131 = vector.extract_strided_slice %123 {offsets = [0, 64], sizes = [8, 32], strides = [1, 1]} : vector<8x128xf32> to vector<8x32xf32>
    %132 = arith.mulf %130, %131 : vector<8x32xf32>
    %133 = arith.addf %129, %132 : vector<8x32xf32>
    %134 = vector.extract_strided_slice %127 {offsets = [0, 96], sizes = [8, 32], strides = [1, 1]} : vector<8x128xf32> to vector<8x32xf32>
    %135 = math.tanh %133 : vector<8x32xf32>
    %136 = arith.mulf %134, %135 : vector<8x32xf32>
    %137 = vector.extract_strided_slice %14 {offsets = [56, 0], sizes = [8, 128], strides = [1, 1]} : vector<64x128xf32> to vector<8x128xf32>
    %cst_33 = arith.constant dense<0.000000e+00> : vector<8x128xf32>
    %138 = tpu.matmul %136, %15, %cst_33 {dimension_numbers = #tpu.dot_dimension_numbers<[1], [0], [0], [1], [0, 0, 1, 1], [], []>} : vector<8x32xf32>, vector<32x128xf32>, vector<8x128xf32> -> vector<8x128xf32>
    %139 = arith.addf %137, %138 : vector<8x128xf32>
    %140 = math.tanh %139 : vector<8x128xf32>
    %cst_34 = arith.constant 1.000000e+00 : f32
    %141 = vector.broadcast %cst_34 : f32 to vector<8x128xf32>
    %142 = arith.addf %140, %141 : vector<8x128xf32>
    %cst_35 = arith.constant 5.000000e-01 : f32
    %143 = vector.broadcast %cst_35 : f32 to vector<8x128xf32>
    %144 = arith.mulf %143, %142 : vector<8x128xf32>
    %145 = vector.extract_strided_slice %144 {offsets = [0, 32], sizes = [8, 32], strides = [1, 1]} : vector<8x128xf32> to vector<8x32xf32>
    %146 = arith.mulf %145, %133 : vector<8x32xf32>
    %147 = vector.extract_strided_slice %144 {offsets = [0, 0], sizes = [8, 32], strides = [1, 1]} : vector<8x128xf32> to vector<8x32xf32>
    %148 = vector.extract_strided_slice %140 {offsets = [0, 64], sizes = [8, 32], strides = [1, 1]} : vector<8x128xf32> to vector<8x32xf32>
    %149 = arith.mulf %147, %148 : vector<8x32xf32>
    %150 = arith.addf %146, %149 : vector<8x32xf32>
    %151 = vector.extract_strided_slice %144 {offsets = [0, 96], sizes = [8, 32], strides = [1, 1]} : vector<8x128xf32> to vector<8x32xf32>
    %152 = math.tanh %150 : vector<8x32xf32>
    %153 = arith.mulf %151, %152 : vector<8x32xf32>
    %c176 = arith.constant 176 : index
    %c0_36 = arith.constant 0 : index
    %154 = vector.load %arg1[%c176, %c0_36] : memref<248x128xf32, #tpu.memory_space<vmem>>, vector<32x128xf32>
    %cst_37 = arith.constant dense<0.000000e+00> : vector<8x128xf32>
    %155 = tpu.matmul %153, %154, %cst_37 {dimension_numbers = #tpu.dot_dimension_numbers<[1], [0], [0], [1], [0, 0, 1, 1], [], []>} : vector<8x32xf32>, vector<32x128xf32>, vector<8x128xf32> -> vector<8x128xf32>
    %c224 = arith.constant 224 : index
    %c0_38 = arith.constant 0 : index
    %156 = vector.load %arg1[%c224, %c0_38] : memref<248x128xf32, #tpu.memory_space<vmem>>, vector<1x128xf32>
    %157 = vector.broadcast %156 : vector<1x128xf32> to vector<8x128xf32>
    %158 = arith.addf %155, %157 : vector<8x128xf32>
    %c232 = arith.constant 232 : index
    %c0_39 = arith.constant 0 : index
    %159 = vector.load %arg1[%c232, %c0_39] : memref<248x128xf32, #tpu.memory_space<vmem>>, vector<1x128xf32>
    %c240 = arith.constant 240 : index
    %c0_40 = arith.constant 0 : index
    %160 = vector.load %arg1[%c240, %c0_40] : memref<248x128xf32, #tpu.memory_space<vmem>>, vector<1x128xf32>
    %cst_41 = arith.constant dense<0.000000e+00> : vector<128xf32>
    %161 = vector.multi_reduction <add>, %158, %cst_41 [0] : vector<8x128xf32> to vector<128xf32>
    %162 = vector.shape_cast %161 : vector<128xf32> to vector<1x128xf32>
    %cst_42 = arith.constant 8.000000e+00 : f32
    %163 = vector.broadcast %cst_42 : f32 to vector<1x128xf32>
    %164 = arith.divf %162, %163 : vector<1x128xf32>
    %165 = vector.broadcast %164 : vector<1x128xf32> to vector<8x128xf32>
    %166 = arith.subf %158, %165 : vector<8x128xf32>
    %167 = vector.broadcast %164 : vector<1x128xf32> to vector<8x128xf32>
    %168 = arith.subf %158, %167 : vector<8x128xf32>
    %169 = arith.mulf %166, %168 : vector<8x128xf32>
    %cst_43 = arith.constant dense<0.000000e+00> : vector<128xf32>
    %170 = vector.multi_reduction <add>, %169, %cst_43 [0] : vector<8x128xf32> to vector<128xf32>
    %171 = vector.shape_cast %170 : vector<128xf32> to vector<1x128xf32>
    %cst_44 = arith.constant 8.000000e+00 : f32
    %172 = vector.broadcast %cst_44 : f32 to vector<1x128xf32>
    %173 = arith.divf %171, %172 : vector<1x128xf32>
    %174 = vector.broadcast %164 : vector<1x128xf32> to vector<8x128xf32>
    %175 = arith.subf %158, %174 : vector<8x128xf32>
    %cst_45 = arith.constant 9.99999974E-6 : f32
    %176 = vector.broadcast %cst_45 : f32 to vector<1x128xf32>
    %177 = arith.addf %173, %176 : vector<1x128xf32>
    %178 = math.rsqrt %177 : vector<1x128xf32>
    %179 = vector.broadcast %178 : vector<1x128xf32> to vector<8x128xf32>
    %180 = arith.mulf %175, %179 : vector<8x128xf32>
    %181 = vector.broadcast %159 : vector<1x128xf32> to vector<8x128xf32>
    %182 = arith.mulf %180, %181 : vector<8x128xf32>
    %183 = vector.broadcast %160 : vector<1x128xf32> to vector<8x128xf32>
    %184 = arith.addf %182, %183 : vector<8x128xf32>
    %c0_46 = arith.constant 0 : index
    %c0_47 = arith.constant 0 : index
    %185 = vector.load %arg2[%c0_46, %c0_47] : memref<168x256xf32, #tpu.memory_space<vmem>>, vector<128x256xf32>
    %cst_48 = arith.constant dense<0.000000e+00> : vector<8x256xf32>
    %186 = tpu.matmul %184, %185, %cst_48 {dimension_numbers = #tpu.dot_dimension_numbers<[1], [0], [0], [1], [0, 0, 1, 1], [], []>} : vector<8x128xf32>, vector<128x256xf32>, vector<8x256xf32> -> vector<8x256xf32>
    %c128 = arith.constant 128 : index
    %c0_49 = arith.constant 0 : index
    %187 = vector.load %arg2[%c128, %c0_49] : memref<168x256xf32, #tpu.memory_space<vmem>>, vector<1x256xf32>
    %188 = vector.broadcast %187 : vector<1x256xf32> to vector<8x256xf32>
    %189 = arith.addf %186, %188 : vector<8x256xf32>
    %c136 = arith.constant 136 : index
    %c0_50 = arith.constant 0 : index
    %190 = vector.load %arg2[%c136, %c0_50] : memref<168x256xf32, #tpu.memory_space<vmem>>, vector<1x256xf32>
    %c144_51 = arith.constant 144 : index
    %c0_52 = arith.constant 0 : index
    %191 = vector.load %arg2[%c144_51, %c0_52] : memref<168x256xf32, #tpu.memory_space<vmem>>, vector<1x256xf32>
    %cst_53 = arith.constant dense<0.000000e+00> : vector<256xf32>
    %192 = vector.multi_reduction <add>, %189, %cst_53 [0] : vector<8x256xf32> to vector<256xf32>
    %193 = vector.shape_cast %192 : vector<256xf32> to vector<1x256xf32>
    %cst_54 = arith.constant 8.000000e+00 : f32
    %194 = vector.broadcast %cst_54 : f32 to vector<1x256xf32>
    %195 = arith.divf %193, %194 : vector<1x256xf32>
    %196 = vector.broadcast %195 : vector<1x256xf32> to vector<8x256xf32>
    %197 = arith.subf %189, %196 : vector<8x256xf32>
    %198 = vector.broadcast %195 : vector<1x256xf32> to vector<8x256xf32>
    %199 = arith.subf %189, %198 : vector<8x256xf32>
    %200 = arith.mulf %197, %199 : vector<8x256xf32>
    %cst_55 = arith.constant dense<0.000000e+00> : vector<256xf32>
    %201 = vector.multi_reduction <add>, %200, %cst_55 [0] : vector<8x256xf32> to vector<256xf32>
    %202 = vector.shape_cast %201 : vector<256xf32> to vector<1x256xf32>
    %cst_56 = arith.constant 8.000000e+00 : f32
    %203 = vector.broadcast %cst_56 : f32 to vector<1x256xf32>
    %204 = arith.divf %202, %203 : vector<1x256xf32>
    %205 = vector.broadcast %195 : vector<1x256xf32> to vector<8x256xf32>
    %206 = arith.subf %189, %205 : vector<8x256xf32>
    %cst_57 = arith.constant 9.99999974E-6 : f32
    %207 = vector.broadcast %cst_57 : f32 to vector<1x256xf32>
    %208 = arith.addf %204, %207 : vector<1x256xf32>
    %209 = math.rsqrt %208 : vector<1x256xf32>
    %210 = vector.broadcast %209 : vector<1x256xf32> to vector<8x256xf32>
    %211 = arith.mulf %206, %210 : vector<8x256xf32>
    %212 = vector.broadcast %190 : vector<1x256xf32> to vector<8x256xf32>
    %213 = arith.mulf %211, %212 : vector<8x256xf32>
    %214 = vector.broadcast %191 : vector<1x256xf32> to vector<8x256xf32>
    %215 = arith.addf %213, %214 : vector<8x256xf32>
    %c152 = arith.constant 152 : index
    %c0_58 = arith.constant 0 : index
    %216 = vector.load %arg2[%c152, %c0_58] : memref<168x256xf32, #tpu.memory_space<vmem>>, vector<1x256xf32>
    %217 = vector.broadcast %216 : vector<1x256xf32> to vector<8x256xf32>
    %218 = arith.mulf %215, %217 : vector<8x256xf32>
    %c160 = arith.constant 160 : index
    %c0_59 = arith.constant 0 : index
    %219 = vector.load %arg2[%c160, %c0_59] : memref<168x256xf32, #tpu.memory_space<vmem>>, vector<1x256xf32>
    %220 = vector.broadcast %219 : vector<1x256xf32> to vector<8x256xf32>
    %221 = arith.addf %218, %220 : vector<8x256xf32>
    %cst_60 = arith.constant dense<0.000000e+00> : vector<8xf32>
    %222 = vector.multi_reduction <add>, %221, %cst_60 [1] : vector<8x256xf32> to vector<8xf32>
    %223 = vector.shape_cast %222 : vector<8xf32> to vector<8x1xf32>
    %c0_61 = arith.constant 0 : index
    %c0_62 = arith.constant 0 : index
    %224 = vector.load %arg3[%c0_61, %c0_62] : memref<8x1xf32, #tpu.memory_space<vmem>>, vector<8x1xf32>
    tpu.vector_store %arg3[%c0_61, %c0_62], %223 {strides = array<i32>} : memref<8x1xf32, #tpu.memory_space<vmem>>, vector<8x1xf32>,
    return
  }
}

</mosaic_0001>

<llo_original>
// kernel: tpu_custom_call.1
$region0: #{tpu_custom_call.1}
  #allocation0 [shape = 'u32[]', space=smem, size = 0x4, offset = 0x4, fixed_abs, tag = 'smem constant byte address 0x4 - core index']
  #allocation1 [shape = 'u32[72,128]{1,0:T(1,128)}', space=vmem, size = 0x9000, scoped, tag = 'internal scratch']
  %s0 = inlined_call_operand.vmem [shape: f32[64,8], index: 0, kind: input, shape index: {}]
  %s1 = inlined_call_operand.hbm [shape: f32[248,128], index: 1, kind: input, shape index: {}]
  %s2 = inlined_call_operand.hbm [shape: f32[168,256], index: 2, kind: input, shape index: {}]
  %s3 = inlined_call_operand.vmem [shape: f32[8,1], index: 3, kind: output, shape index: {}]
  %s4 = sld [smem:[#allocation0]]
  $region30: #{tpu_custom_call.1} parent=0
    _
  %s6 = ssub.s32 1, %s4
  %s7 = scalar_select 0, %s6, %s4
  $region1: #{tpu_custom_call.1} parent=0
    #allocation2 [shape = 'u8[126976]{0}', space=vmem, size = 0x1f000, scoped, tag = 'input window, operand 1, single buffered']
    #allocation3 [shape = 's32[1]{0}', space=sflag, size = 0x4, scoped, tag = 'scoped memory for tpu_custom_call.1']
    #allocation4 [shape = 'u8[172032]{0}', space=vmem, size = 0x2a000, scoped, tag = 'input window, operand 2, single buffered']
    #allocation5 [shape = 's32[1]{0}', space=sflag, size = 0x4, scoped, tag = 'scoped memory for tpu_custom_call.1']
    %8 = vsyncpa [#allocation3], 0
    %9 = vsyncpa [#allocation5], 0
    // Predicated region
    $region2: #{tpu_custom_call.1} parent=1 // pred_check
      _
    $region3: #{tpu_custom_call.1} parent=1 // pred_check_branch
      %11 = sbr.rel (0) target = $region5
    $region4: #{tpu_custom_call.1} parent=1 // pred_region
      _
    $region5: #{tpu_custom_call.1} parent=1 // pred_fallthru
      _
    // Predicated region
    $region6: #{tpu_custom_call.1} parent=1 // pred_check
      _
    $region7: #{tpu_custom_call.1} parent=1 // pred_check_branch
      %13 = sbr.rel (0) target = $region9
    $region8: #{tpu_custom_call.1} parent=1 // pred_region
      %15 = vsyncadd [#allocation3], 0
      %s16 = sshll.u32 %s1, 4
      %s17 = int_to_ptr.hbm [resolvable:$true] %s16
      %s18 = sshll.u32 [#allocation2], 4
      %s19 = int_to_ptr.vmem [resolvable:$true] %s18
      %24 = dma.hbm_to_vmem [thread:$0]  %s17, 3968, %s19, [#allocation3], 128, 128, 8
    $region9: #{tpu_custom_call.1} parent=1 // pred_fallthru
      _
    // Predicated region
    $region10: #{tpu_custom_call.1} parent=1 // pred_check
      _
    $region11: #{tpu_custom_call.1} parent=1 // pred_check_branch
      %26 = sbr.rel (0) target = $region13
    $region12: #{tpu_custom_call.1} parent=1 // pred_region
      %28 = vsyncadd [#allocation5], 0
      %s29 = sshll.u32 %s2, 4
      %s30 = int_to_ptr.hbm [resolvable:$true] %s29
      %s31 = sshll.u32 [#allocation4], 4
      %s32 = int_to_ptr.vmem [resolvable:$true] %s31
      %37 = dma.hbm_to_vmem [thread:$0]  %s30, 5376, %s32, [#allocation5], 256, 256, 16
    $region13: #{tpu_custom_call.1} parent=1 // pred_fallthru
      _
    // Predicated region
    $region14: #{tpu_custom_call.1} parent=1 // pred_check
      _
    $region15: #{tpu_custom_call.1} parent=1 // pred_check_branch
      %39 = sbr.rel (0) target = $region17
    $region16: #{tpu_custom_call.1} parent=1 // pred_region
      %41 = dma.done [#allocation3], 3968
    $region17: #{tpu_custom_call.1} parent=1 // pred_fallthru
      _
    // Predicated region
    $region18: #{tpu_custom_call.1} parent=1 // pred_check
      _
    $region19: #{tpu_custom_call.1} parent=1 // pred_check_branch
      %43 = sbr.rel (0) target = $region21
    $region20: #{tpu_custom_call.1} parent=1 // pred_region
      %45 = dma.done [#allocation5], 5376
    $region21: #{tpu_custom_call.1} parent=1 // pred_fallthru
      _
    %v46 = vld [vmem:[%s0] sm:$0xff]
    %v47 = vld [vmem:[%s0 + $0x8] sm:$0xff]
    %v48 = vld [vmem:[%s0 + $0x10] sm:$0xff]
    %v49 = vld [vmem:[%s0 + $0x18] sm:$0xff]
    %v50 = vld [vmem:[%s0 + $0x20] sm:$0xff]
    %v51 = vld [vmem:[%s0 + $0x28] sm:$0xff]
    %v52 = vld [vmem:[%s0 + $0x30] sm:$0xff]
    %v53 = vld [vmem:[%s0 + $0x38] sm:$0xff]
    %v54 = vld [vmem:[#allocation2] sm:$0xff]
    %v55 = vld [vmem:[#allocation2 + $0xd0] sm:$0x1]
    %v56 = vperm.slane %v55, 0
    %vm57 = vcmask 64512
    %v59 = vsel %vm57, %v46, 0
    %v62 = vsel %vm57, %v47, 0
    %v65 = vsel %vm57, %v48, 0
    %v68 = vsel %vm57, %v49, 0
    %v71 = vsel %vm57, %v50, 0
    %v74 = vsel %vm57, %v51, 0
    %v77 = vsel %vm57, %v52, 0
    %v80 = vsel %vm57, %v53, 0
    %82 = vmatpush.msra.mxu0 0.0
    %83 = vmatpush.msra.mxu0 0.0
    %84 = vmatpush.msra.mxu0 0.0
    %85 = vmatpush.msra.mxu0 0.0
    %86 = vmatpush.msra.mxu0 0.0
    %87 = vmatpush.msra.mxu0 0.0
    %88 = vmatpush.msra.mxu0 0.0
    %89 = vmatpush.msra.mxu0 0.0
    %90 = vmatpush.msra.mxu0 0.0
    %91 = vmatpush.msra.mxu0 0.0
    %92 = vmatpush.msra.mxu0 0.0
    %93 = vmatpush.msra.mxu0 0.0
    %94 = vmatpush.msra.mxu0 0.0
    %95 = vmatpush.msra.mxu0 0.0
    %96 = vmatpush.msra.mxu0 0.0
    %97 = vmatpush.msra.mxu0 %v54
    %98 = vmatmul.f32.gmra.mxu0 %v59
    %v99 = vpop.f32.mrf.mxu0
    %v100 = vadd.f32 %v56, %v99
    %101 = vmatmul.f32.gmra.mxu0 %v62
    %v102 = vpop.f32.mrf.mxu0
    %v103 = vadd.f32 %v56, %v102
    %104 = vmatmul.f32.gmra.mxu0 %v65
    %v105 = vpop.f32.mrf.mxu0
    %v106 = vadd.f32 %v56, %v105
    %107 = vmatmul.f32.gmra.mxu0 %v68
    %v108 = vpop.f32.mrf.mxu0
    %v109 = vadd.f32 %v56, %v108
    %110 = vmatmul.f32.gmra.mxu0 %v71
    %v111 = vpop.f32.mrf.mxu0
    %v112 = vadd.f32 %v56, %v111
    %113 = vmatmul.f32.gmra.mxu0 %v74
    %v114 = vpop.f32.mrf.mxu0
    %v115 = vadd.f32 %v56, %v114
    %116 = vmatmul.f32.gmra.mxu0 %v77
    %v117 = vpop.f32.mrf.mxu0
    %v118 = vadd.f32 %v56, %v117
    %119 = vmatmul.f32.gmra.mxu0 %v80
    %v120 = vpop.f32.mrf.mxu0
    %v121 = vadd.f32 %v56, %v120
    %122 = vdwg.mxu0
    %v123 = vand.u32 2147483647, %v100
    %vm124 = vcmp.le.f32.partialorder %v123, 0.7853982
    %vm125 = vcmp.lt.s32.totalorder %v100, 0
    %v126 = vand.u32 %v100, 2139095040
    %v127 = vshrl.u32 %v126, 23
    %v128 = vsub.s32 %v127, 127
    %v129 = vand.u32 2147483647, %v100
    %v130 = vand.u32 %v129, 8388607
    %v131 = vor.u32 %v130, 8388608
    %v132 = vsub.s32 0, %v131
    %v133 = vadd.s32 %v128, 1
    %vm134 = vcmp.gt.s32.totalorder %v133, 0
    %v135 = vsel %vm134, %v133, 0
    %v136 = vshrl.u32 %v135, 5
    %v137 = vand.u32 %v135, 31
    %v138 = vsub.s32 32, %v137
    %v139 = vshrl.u32 683565275, %v138
    %v140 = vshll.u32 683565275, %v137
    %v141 = vshrl.u32 2475754826, %v138
    %v142 = vor.u32 %v140, %v141
    %v143 = vshll.u32 2475754826, %v137
    %v144 = vshrl.u32 2131351028, %v138
    %v145 = vor.u32 %v143, %v144
    %v146 = vshll.u32 2131351028, %v137
    %v147 = vshrl.u32 2102212464, %v138
    %v148 = vor.u32 %v146, %v147
    %v149 = vshll.u32 2102212464, %v137
    %v150 = vshrl.u32 920167782, %v138
    %v151 = vor.u32 %v149, %v150
    %v152 = vshll.u32 920167782, %v137
    %v153 = vshrl.u32 1326507024, %v138
    %v154 = vor.u32 %v152, %v153
    %vm155 = vcmp.lt.s32.totalorder %v136, 1
    %vm156 = vcmp.lt.s32.totalorder %v136, 2
    %vm157 = vcmp.lt.s32.totalorder %v136, 3
    %vm158 = vcmp.lt.s32.totalorder %v136, 4
    %v159 = vsel %vm155, %v139, %v142
    %v160 = vsel %vm158, %v148, 2102212464
    %v161 = vsel %vm157, %v145, %v160
    %v162 = vsel %vm156, %v159, %v161
    %v163 = vsel %vm155, %v142, %v145
    %v164 = vsel %vm158, %v151, 920167782
    %v165 = vsel %vm157, %v148, %v164
    %v166 = vsel %vm156, %v163, %v165
    %v167 = vsel %vm155, %v145, %v148
    %v168 = vsel %vm158, %v154, 1326507024
    %v169 = vsel %vm157, %v151, %v168
    %v170 = vsel %vm156, %v167, %v169
    %v171 = vshll.u32 %v131, 8
    %v172 = vand.u32 %v171, 65535
    %v173 = vshrl.u32 %v171, 16
    %v174 = vand.u32 %v170, 65535
    %v175 = vshrl.u32 %v170, 16
    %v176 = vmul.u32 %v172, %v174
    %v177 = vmul.u32 %v172, %v175
    %v178 = vmul.u32 %v173, %v174
    %v179 = vmul.u32 %v173, %v175
    %v180 = vshll.u32 %v177, 16
    %v181 = vshrl.u32 %v177, 16
    %v182 = vshll.u32 %v178, 16
    %v183 = vshrl.u32 %v178, 16
    %vm184 = vc.u32 %v176, %v180
    %v185 = vsel %vm184, 1, 0
    %v186 = vadd.s32 %v176, %v180
    %v187 = vadd.s32 %v179, %v185
    %vm188 = vc.u32 %v186, %v182
    %v189 = vsel %vm188, 1, 0
    %v190 = vadd.s32 %v186, %v182
    %v191 = vadd.s32 %v187, %v189
    %v192 = vadd.s32 %v191, %v181
    %v193 = vadd.s32 %v192, %v183
    %v194 = vand.u32 %v171, 65535
    %v195 = vshrl.u32 %v171, 16
    %v196 = vand.u32 %v166, 65535
    %v197 = vshrl.u32 %v166, 16
    %v198 = vmul.u32 %v194, %v196
    %v199 = vmul.u32 %v194, %v197
    %v200 = vmul.u32 %v195, %v196
    %v201 = vmul.u32 %v195, %v197
    %v202 = vshll.u32 %v199, 16
    %v203 = vshrl.u32 %v199, 16
    %v204 = vshll.u32 %v200, 16
    %v205 = vshrl.u32 %v200, 16
    %vm206 = vc.u32 %v198, %v202
    %v207 = vsel %vm206, 1, 0
    %v208 = vadd.s32 %v198, %v202
    %v209 = vadd.s32 %v201, %v207
    %vm210 = vc.u32 %v208, %v204
    %v211 = vsel %vm210, 1, 0
    %v212 = vadd.s32 %v208, %v204
    %v213 = vadd.s32 %v209, %v211
    %v214 = vadd.s32 %v213, %v203
    %v215 = vadd.s32 %v214, %v205
    %v216 = vmul.u32 %v171, %v162
    %v217 = vadd.s32 %v193, %v212
    %vm218 = vc.u32 %v193, %v212
    %v219 = vadd.s32 %v215, 1
    %v220 = vsel %vm218, %v219, %v215
    %v221 = vadd.s32 %v216, %v220
    %v222 = vadd.s32 %v221, 536870912
    %v223 = vshrl.u32 %v222, 30
    %v224 = vshll.u32 %v223, 30
    %v225 = vsub.s32 %v221, %v224
    %vm226 = vcmp.lt.s32.totalorder %v225, 0
    %v227 = vsub.s32 0, %v225
    %v228 = vsel %vm226, %v227, %v225
    %v229 = vclz %v228
    %v230 = vsub.s32 %v229, 2
    %vm231 = vcmp.gt.s32.totalorder 0, %v230
    %v232 = vsel %vm231, 0, %v230
    %v233 = vsub.s32 32, %v232
    %v234 = vshll.u32 %v225, %v232
    %v235 = vshrl.u32 %v217, %v233
    %v236 = vor.u32 %v234, %v235
    %v237 = vsub.s32 4294967266, %v232
    %v238 = vadd.s32 %v237, 127
    %v239 = vshll.u32 %v238, 23
    %v240 = vor.u32 4788187, %v239
    %v241 = vand.u32 2147483647, %v240
    %v243 = vcvt.s32.f32 %v236
    %v244 = vmul.f32 %v243, %v241
    %v245 = vxor.u32 %v244, 2147483648
    %v246 = vsel %vm125, %v245, %v244
    %v247 = vsub.s32 4, %v223
    %v248 = vsel %vm125, %v247, %v223
    %v249 = vsel %vm124, %v100, %v246
    %v250 = vsel %vm124, 0, %v248
    %v251 = vmul.f32 %v249, %v249
    %v252 = vmul.f32 %v251, -0.001358992
    %v253 = vadd.f32 %v252, 0.041655596
    %v254 = vmul.f32 %v251, %v253
    %v255 = vadd.f32 %v254, -0.4999988
    %v256 = vmul.f32 %v251, %v255
    %v257 = vadd.f32 1.0, %v256
    %v258 = vmul.f32 %v249, %v249
    %v259 = vmul.f32 %v258, -0.00019511016
    %v260 = vadd.f32 %v259, 0.008332121
    %v261 = vmul.f32 %v258, %v260
    %v262 = vadd.f32 %v261, -0.16666654
    %v263 = vmul.f32 %v258, %v262
    %v264 = vadd.f32 %v263, 1.0
    %v265 = vmul.f32 %v264, %v249
    %vm266 = vweird.f32 %v100
    %v267 = vadd.s32 %v250, 3
    %v268 = vand.u32 %v267, 3
    %vm269 = vcmp.lt.s32.totalorder %v268, 2
    %vm270 = vcmp.eq.s32.totalorder %v268, 0
    %v271 = vxor.u32 %v265, 2147483648
    %v272 = vsel %vm270, %v257, %v271
    %vm273 = vcmp.eq.s32.totalorder %v268, 2
    %v274 = vxor.u32 %v257, 2147483648
    %v275 = vsel %vm273, %v274, %v265
    %v276 = vsel %vm269, %v272, %v275
    %v277 = vsel %vm266, nan, %v276
    %v278 = vand.u32 2147483647, %v103
    %vm279 = vcmp.le.f32.partialorder %v278, 0.7853982
    %vm280 = vcmp.lt.s32.totalorder %v103, 0
    %v281 = vand.u32 %v103, 2139095040
    %v282 = vshrl.u32 %v281, 23
    %v283 = vsub.s32 %v282, 127
    %v284 = vand.u32 2147483647, %v103
    %v285 = vand.u32 %v284, 8388607
    %v286 = vor.u32 %v285, 8388608
    %v287 = vsub.s32 0, %v286
    %v288 = vadd.s32 %v283, 1
    %vm289 = vcmp.gt.s32.totalorder %v288, 0
    %v290 = vsel %vm289, %v288, 0
    %v291 = vshrl.u32 %v290, 5
    %v292 = vand.u32 %v290, 31
    %v293 = vsub.s32 32, %v292
    %v294 = vshrl.u32 683565275, %v293
    %v295 = vshll.u32 683565275, %v292
    %v296 = vshrl.u32 2475754826, %v293
    %v297 = vor.u32 %v295, %v296
    %v298 = vshll.u32 2475754826, %v292
    %v299 = vshrl.u32 2131351028, %v293
    %v300 = vor.u32 %v298, %v299
    %v301 = vshll.u32 2131351028, %v292
    %v302 = vshrl.u32 2102212464, %v293
    %v303 = vor.u32 %v301, %v302
    %v304 = vshll.u32 2102212464, %v292
    %v305 = vshrl.u32 920167782, %v293
    %v306 = vor.u32 %v304, %v305
    %v307 = vshll.u32 920167782, %v292
    %v308 = vshrl.u32 1326507024, %v293
    %v309 = vor.u32 %v307, %v308
    %vm310 = vcmp.lt.s32.totalorder %v291, 1
    %vm311 = vcmp.lt.s32.totalorder %v291, 2
    %vm312 = vcmp.lt.s32.totalorder %v291, 3
    %vm313 = vcmp.lt.s32.totalorder %v291, 4
    %v314 = vsel %vm310, %v294, %v297
    %v315 = vsel %vm313, %v303, 2102212464
    %v316 = vsel %vm312, %v300, %v315
    %v317 = vsel %vm311, %v314, %v316
    %v318 = vsel %vm310, %v297, %v300
    %v319 = vsel %vm313, %v306, 920167782
    %v320 = vsel %vm312, %v303, %v319
    %v321 = vsel %vm311, %v318, %v320
    %v322 = vsel %vm310, %v300, %v303
    %v323 = vsel %vm313, %v309, 1326507024
    %v324 = vsel %vm312, %v306, %v323
    %v325 = vsel %vm311, %v322, %v324
    %v326 = vshll.u32 %v286, 8
    %v327 = vand.u32 %v326, 65535
    %v328 = vshrl.u32 %v326, 16
    %v329 = vand.u32 %v325, 65535
    %v330 = vshrl.u32 %v325, 16
    %v331 = vmul.u32 %v327, %v329
    %v332 = vmul.u32 %v327, %v330
    %v333 = vmul.u32 %v328, %v329
    %v334 = vmul.u32 %v328, %v330
    %v335 = vshll.u32 %v332, 16
    %v336 = vshrl.u32 %v332, 16
    %v337 = vshll.u32 %v333, 16
    %v338 = vshrl.u32 %v333, 16
    %vm339 = vc.u32 %v331, %v335
    %v340 = vsel %vm339, 1, 0
    %v341 = vadd.s32 %v331, %v335
    %v342 = vadd.s32 %v334, %v340
    %vm343 = vc.u32 %v341, %v337
    %v344 = vsel %vm343, 1, 0
    %v345 = vadd.s32 %v341, %v337
    %v346 = vadd.s32 %v342, %v344
    %v347 = vadd.s32 %v346, %v336
    %v348 = vadd.s32 %v347, %v338
    %v349 = vand.u32 %v326, 65535
    %v350 = vshrl.u32 %v326, 16
    %v351 = vand.u32 %v321, 65535
    %v352 = vshrl.u32 %v321, 16
    %v353 = vmul.u32 %v349, %v351
    %v354 = vmul.u32 %v349, %v352
    %v355 = vmul.u32 %v350, %v351
    %v356 = vmul.u32 %v350, %v352
    %v357 = vshll.u32 %v354, 16
    %v358 = vshrl.u32 %v354, 16
    %v359 = vshll.u32 %v355, 16
    %v360 = vshrl.u32 %v355, 16
    %vm361 = vc.u32 %v353, %v357
    %v362 = vsel %vm361, 1, 0
    %v363 = vadd.s32 %v353, %v357
    %v364 = vadd.s32 %v356, %v362
    %vm365 = vc.u32 %v363, %v359
    %v366 = vsel %vm365, 1, 0
    %v367 = vadd.s32 %v363, %v359
    %v368 = vadd.s32 %v364, %v366
    %v369 = vadd.s32 %v368, %v358
    %v370 = vadd.s32 %v369, %v360
    %v371 = vmul.u32 %v326, %v317
    %v372 = vadd.s32 %v348, %v367
    %vm373 = vc.u32 %v348, %v367
    %v374 = vadd.s32 %v370, 1
    %v375 = vsel %vm373, %v374, %v370
    %v376 = vadd.s32 %v371, %v375
    %v377 = vadd.s32 %v376, 536870912
    %v378 = vshrl.u32 %v377, 30
    %v379 = vshll.u32 %v378, 30
    %v380 = vsub.s32 %v376, %v379
    %vm381 = vcmp.lt.s32.totalorder %v380, 0
    %v382 = vsub.s32 0, %v380
    %v383 = vsel %vm381, %v382, %v380
    %v384 = vclz %v383
    %v385 = vsub.s32 %v384, 2
    %vm386 = vcmp.gt.s32.totalorder 0, %v385
    %v387 = vsel %vm386, 0, %v385
    %v388 = vsub.s32 32, %v387
    %v389 = vshll.u32 %v380, %v387
    %v390 = vshrl.u32 %v372, %v388
    %v391 = vor.u32 %v389, %v390
    %v392 = vsub.s32 4294967266, %v387
    %v393 = vadd.s32 %v392, 127
    %v394 = vshll.u32 %v393, 23
    %v395 = vor.u32 4788187, %v394
    %v396 = vand.u32 2147483647, %v395
    %v398 = vcvt.s32.f32 %v391
    %v399 = vmul.f32 %v398, %v396
    %v400 = vxor.u32 %v399, 2147483648
    %v401 = vsel %vm280, %v400, %v399
    %v402 = vsub.s32 4, %v378
    %v403 = vsel %vm280, %v402, %v378
    %v404 = vsel %vm279, %v103, %v401
    %v405 = vsel %vm279, 0, %v403
    %v406 = vmul.f32 %v404, %v404
    %v407 = vmul.f32 %v406, -0.001358992
    %v408 = vadd.f32 %v407, 0.041655596
    %v409 = vmul.f32 %v406, %v408
    %v410 = vadd.f32 %v409, -0.4999988
    %v411 = vmul.f32 %v406, %v410
    %v412 = vadd.f32 1.0, %v411
    %v413 = vmul.f32 %v404, %v404
    %v414 = vmul.f32 %v413, -0.00019511016
    %v415 = vadd.f32 %v414, 0.008332121
    %v416 = vmul.f32 %v413, %v415
    %v417 = vadd.f32 %v416, -0.16666654
    %v418 = vmul.f32 %v413, %v417
    %v419 = vadd.f32 %v418, 1.0
    %v420 = vmul.f32 %v419, %v404
    %vm421 = vweird.f32 %v103
    %v422 = vadd.s32 %v405, 3
    %v423 = vand.u32 %v422, 3
    %vm424 = vcmp.lt.s32.totalorder %v423, 2
    %vm425 = vcmp.eq.s32.totalorder %v423, 0
    %v426 = vxor.u32 %v420, 2147483648
    %v427 = vsel %vm425, %v412, %v426
    %vm428 = vcmp.eq.s32.totalorder %v423, 2
    %v429 = vxor.u32 %v412, 2147483648
    %v430 = vsel %vm428, %v429, %v420
    %v431 = vsel %vm424, %v427, %v430
    %v432 = vsel %vm421, nan, %v431
    %v433 = vand.u32 2147483647, %v106
    %vm434 = vcmp.le.f32.partialorder %v433, 0.7853982
    %vm435 = vcmp.lt.s32.totalorder %v106, 0
    %v436 = vand.u32 %v106, 2139095040
    %v437 = vshrl.u32 %v436, 23
    %v438 = vsub.s32 %v437, 127
    %v439 = vand.u32 2147483647, %v106
    %v440 = vand.u32 %v439, 8388607
    %v441 = vor.u32 %v440, 8388608
    %v442 = vsub.s32 0, %v441
    %v443 = vadd.s32 %v438, 1
    %vm444 = vcmp.gt.s32.totalorder %v443, 0
    %v445 = vsel %vm444, %v443, 0
    %v446 = vshrl.u32 %v445, 5
    %v447 = vand.u32 %v445, 31
    %v448 = vsub.s32 32, %v447
    %v449 = vshrl.u32 683565275, %v448
    %v450 = vshll.u32 683565275, %v447
    %v451 = vshrl.u32 2475754826, %v448
    %v452 = vor.u32 %v450, %v451
    %v453 = vshll.u32 2475754826, %v447
    %v454 = vshrl.u32 2131351028, %v448
    %v455 = vor.u32 %v453, %v454
    %v456 = vshll.u32 2131351028, %v447
    %v457 = vshrl.u32 2102212464, %v448
    %v458 = vor.u32 %v456, %v457
    %v459 = vshll.u32 2102212464, %v447
    %v460 = vshrl.u32 920167782, %v448
    %v461 = vor.u32 %v459, %v460
    %v462 = vshll.u32 920167782, %v447
    %v463 = vshrl.u32 1326507024, %v448
    %v464 = vor.u32 %v462, %v463
    %vm465 = vcmp.lt.s32.totalorder %v446, 1
    %vm466 = vcmp.lt.s32.totalorder %v446, 2
    %vm467 = vcmp.lt.s32.totalorder %v446, 3
    %vm468 = vcmp.lt.s32.totalorder %v446, 4
    %v469 = vsel %vm465, %v449, %v452
    %v470 = vsel %vm468, %v458, 2102212464
    %v471 = vsel %vm467, %v455, %v470
    %v472 = vsel %vm466, %v469, %v471
    %v473 = vsel %vm465, %v452, %v455
    %v474 = vsel %vm468, %v461, 920167782
    %v475 = vsel %vm467, %v458, %v474
    %v476 = vsel %vm466, %v473, %v475
    %v477 = vsel %vm465, %v455, %v458
    %v478 = vsel %vm468, %v464, 1326507024
    %v479 = vsel %vm467, %v461, %v478
    %v480 = vsel %vm466, %v477, %v479
    %v481 = vshll.u32 %v441, 8
    %v482 = vand.u32 %v481, 65535
    %v483 = vshrl.u32 %v481, 16
    %v484 = vand.u32 %v480, 65535
    %v485 = vshrl.u32 %v480, 16
    %v486 = vmul.u32 %v482, %v484
    %v487 = vmul.u32 %v482, %v485
    %v488 = vmul.u32 %v483, %v484
    %v489 = vmul.u32 %v483, %v485
    %v490 = vshll.u32 %v487, 16
    %v491 = vshrl.u32 %v487, 16
    %v492 = vshll.u32 %v488, 16
    %v493 = vshrl.u32 %v488, 16
    %vm494 = vc.u32 %v486, %v490
    %v495 = vsel %vm494, 1, 0
    %v496 = vadd.s32 %v486, %v490
    %v497 = vadd.s32 %v489, %v495
    %vm498 = vc.u32 %v496, %v492
    %v499 = vsel %vm498, 1, 0
    %v500 = vadd.s32 %v496, %v492
    %v501 = vadd.s32 %v497, %v499
    %v502 = vadd.s32 %v501, %v491
    %v503 = vadd.s32 %v502, %v493
    %v504 = vand.u32 %v481, 65535
    %v505 = vshrl.u32 %v481, 16
    %v506 = vand.u32 %v476, 65535
    %v507 = vshrl.u32 %v476, 16
    %v508 = vmul.u32 %v504, %v506
    %v509 = vmul.u32 %v504, %v507
    %v510 = vmul.u32 %v505, %v506
    %v511 = vmul.u32 %v505, %v507
    %v512 = vshll.u32 %v509, 16
    %v513 = vshrl.u32 %v509, 16
    %v514 = vshll.u32 %v510, 16
    %v515 = vshrl.u32 %v510, 16
    %vm516 = vc.u32 %v508, %v512
    %v517 = vsel %vm516, 1, 0
    %v518 = vadd.s32 %v508, %v512
    %v519 = vadd.s32 %v511, %v517
    %vm520 = vc.u32 %v518, %v514
    %v521 = vsel %vm520, 1, 0
    %v522 = vadd.s32 %v518, %v514
    %v523 = vadd.s32 %v519, %v521
    %v524 = vadd.s32 %v523, %v513
    %v525 = vadd.s32 %v524, %v515
    %v526 = vmul.u32 %v481, %v472
    %v527 = vadd.s32 %v503, %v522
    %vm528 = vc.u32 %v503, %v522
    %v529 = vadd.s32 %v525, 1
    %v530 = vsel %vm528, %v529, %v525
    %v531 = vadd.s32 %v526, %v530
    %v532 = vadd.s32 %v531, 536870912
    %v533 = vshrl.u32 %v532, 30
    %v534 = vshll.u32 %v533, 30
    %v535 = vsub.s32 %v531, %v534
    %vm536 = vcmp.lt.s32.totalorder %v535, 0
    %v537 = vsub.s32 0, %v535
    %v538 = vsel %vm536, %v537, %v535
    %v539 = vclz %v538
    %v540 = vsub.s32 %v539, 2
    %vm541 = vcmp.gt.s32.totalorder 0, %v540
    %v542 = vsel %vm541, 0, %v540
    %v543 = vsub.s32 32, %v542
    %v544 = vshll.u32 %v535, %v542
    %v545 = vshrl.u32 %v527, %v543
    %v546 = vor.u32 %v544, %v545
    %v547 = vsub.s32 4294967266, %v542
    %v548 = vadd.s32 %v547, 127
    %v549 = vshll.u32 %v548, 23
    %v550 = vor.u32 4788187, %v549
    %v551 = vand.u32 2147483647, %v550
    %v553 = vcvt.s32.f32 %v546
    %v554 = vmul.f32 %v553, %v551
    %v555 = vxor.u32 %v554, 2147483648
    %v556 = vsel %vm435, %v555, %v554
    %v557 = vsub.s32 4, %v533
    %v558 = vsel %vm435, %v557, %v533
    %v559 = vsel %vm434, %v106, %v556
    %v560 = vsel %vm434, 0, %v558
    %v561 = vmul.f32 %v559, %v559
    %v562 = vmul.f32 %v561, -0.001358992
    %v563 = vadd.f32 %v562, 0.041655596
    %v564 = vmul.f32 %v561, %v563
    %v565 = vadd.f32 %v564, -0.4999988
    %v566 = vmul.f32 %v561, %v565
    %v567 = vadd.f32 1.0, %v566
    %v568 = vmul.f32 %v559, %v559
    %v569 = vmul.f32 %v568, -0.00019511016
    %v570 = vadd.f32 %v569, 0.008332121
    %v571 = vmul.f32 %v568, %v570
    %v572 = vadd.f32 %v571, -0.16666654
    %v573 = vmul.f32 %v568, %v572
    %v574 = vadd.f32 %v573, 1.0
    %v575 = vmul.f32 %v574, %v559
    %vm576 = vweird.f32 %v106
    %v577 = vadd.s32 %v560, 3
    %v578 = vand.u32 %v577, 3
    %vm579 = vcmp.lt.s32.totalorder %v578, 2
    %vm580 = vcmp.eq.s32.totalorder %v578, 0
    %v581 = vxor.u32 %v575, 2147483648
    %v582 = vsel %vm580, %v567, %v581
    %vm583 = vcmp.eq.s32.totalorder %v578, 2
    %v584 = vxor.u32 %v567, 2147483648
    %v585 = vsel %vm583, %v584, %v575
    %v586 = vsel %vm579, %v582, %v585
    %v587 = vsel %vm576, nan, %v586
    %v588 = vand.u32 2147483647, %v109
    %vm589 = vcmp.le.f32.partialorder %v588, 0.7853982
    %vm590 = vcmp.lt.s32.totalorder %v109, 0
    %v591 = vand.u32 %v109, 2139095040
    %v592 = vshrl.u32 %v591, 23
    %v593 = vsub.s32 %v592, 127
    %v594 = vand.u32 2147483647, %v109
    %v595 = vand.u32 %v594, 8388607
    %v596 = vor.u32 %v595, 8388608
    %v597 = vsub.s32 0, %v596
    %v598 = vadd.s32 %v593, 1
    %vm599 = vcmp.gt.s32.totalorder %v598, 0
    %v600 = vsel %vm599, %v598, 0
    %v601 = vshrl.u32 %v600, 5
    %v602 = vand.u32 %v600, 31
    %v603 = vsub.s32 32, %v602
    %v604 = vshrl.u32 683565275, %v603
    %v605 = vshll.u32 683565275, %v602
    %v606 = vshrl.u32 2475754826, %v603
    %v607 = vor.u32 %v605, %v606
    %v608 = vshll.u32 2475754826, %v602
    %v609 = vshrl.u32 2131351028, %v603
    %v610 = vor.u32 %v608, %v609
    %v611 = vshll.u32 2131351028, %v602
    %v612 = vshrl.u32 2102212464, %v603
    %v613 = vor.u32 %v611, %v612
    %v614 = vshll.u32 2102212464, %v602
    %v615 = vshrl.u32 920167782, %v603
    %v616 = vor.u32 %v614, %v615
    %v617 = vshll.u32 920167782, %v602
    %v618 = vshrl.u32 1326507024, %v603
    %v619 = vor.u32 %v617, %v618
    %vm620 = vcmp.lt.s32.totalorder %v601, 1
    %vm621 = vcmp.lt.s32.totalorder %v601, 2
    %vm622 = vcmp.lt.s32.totalorder %v601, 3
    %vm623 = vcmp.lt.s32.totalorder %v601, 4
    %v624 = vsel %vm620, %v604, %v607
    %v625 = vsel %vm623, %v613, 2102212464
    %v626 = vsel %vm622, %v610, %v625
    %v627 = vsel %vm621, %v624, %v626
    %v628 = vsel %vm620, %v607, %v610
    %v629 = vsel %vm623, %v616, 920167782
    %v630 = vsel %vm622, %v613, %v629
    %v631 = vsel %vm621, %v628, %v630
    %v632 = vsel %vm620, %v610, %v613
    %v633 = vsel %vm623, %v619, 1326507024
    %v634 = vsel %vm622, %v616, %v633
    %v635 = vsel %vm621, %v632, %v634
    %v636 = vshll.u32 %v596, 8
    %v637 = vand.u32 %v636, 65535
    %v638 = vshrl.u32 %v636, 16
    %v639 = vand.u32 %v635, 65535
    %v640 = vshrl.u32 %v635, 16
    %v641 = vmul.u32 %v637, %v639
    %v642 = vmul.u32 %v637, %v640
    %v643 = vmul.u32 %v638, %v639
    %v644 = vmul.u32 %v638, %v640
    %v645 = vshll.u32 %v642, 16
    %v646 = vshrl.u32 %v642, 16
    %v647 = vshll.u32 %v643, 16
    %v648 = vshrl.u32 %v643, 16
    %vm649 = vc.u32 %v641, %v645
    %v650 = vsel %vm649, 1, 0
    %v651 = vadd.s32 %v641, %v645
    %v652 = vadd.s32 %v644, %v650
    %vm653 = vc.u32 %v651, %v647
    %v654 = vsel %vm653, 1, 0
    %v655 = vadd.s32 %v651, %v647
    %v656 = vadd.s32 %v652, %v654
    %v657 = vadd.s32 %v656, %v646
    %v658 = vadd.s32 %v657, %v648
    %v659 = vand.u32 %v636, 65535
    %v660 = vshrl.u32 %v636, 16
    %v661 = vand.u32 %v631, 65535
    %v662 = vshrl.u32 %v631, 16
    %v663 = vmul.u32 %v659, %v661
    %v664 = vmul.u32 %v659, %v662
    %v665 = vmul.u32 %v660, %v661
    %v666 = vmul.u32 %v660, %v662
    %v667 = vshll.u32 %v664, 16
    %v668 = vshrl.u32 %v664, 16
    %v669 = vshll.u32 %v665, 16
    %v670 = vshrl.u32 %v665, 16
    %vm671 = vc.u32 %v663, %v667
    %v672 = vsel %vm671, 1, 0
    %v673 = vadd.s32 %v663, %v667
    %v674 = vadd.s32 %v666, %v672
    %vm675 = vc.u32 %v673, %v669
    %v676 = vsel %vm675, 1, 0
    %v677 = vadd.s32 %v673, %v669
    %v678 = vadd.s32 %v674, %v676
    %v679 = vadd.s32 %v678, %v668
    %v680 = vadd.s32 %v679, %v670
    %v681 = vmul.u32 %v636, %v627
    %v682 = vadd.s32 %v658, %v677
    %vm683 = vc.u32 %v658, %v677
    %v684 = vadd.s32 %v680, 1
    %v685 = vsel %vm683, %v684, %v680
    %v686 = vadd.s32 %v681, %v685
    %v687 = vadd.s32 %v686, 536870912
    %v688 = vshrl.u32 %v687, 30
    %v689 = vshll.u32 %v688, 30
    %v690 = vsub.s32 %v686, %v689
    %vm691 = vcmp.lt.s32.totalorder %v690, 0
    %v692 = vsub.s32 0, %v690
    %v693 = vsel %vm691, %v692, %v690
    %v694 = vclz %v693
    %v695 = vsub.s32 %v694, 2
    %vm696 = vcmp.gt.s32.totalorder 0, %v695
    %v697 = vsel %vm696, 0, %v695
    %v698 = vsub.s32 32, %v697
    %v699 = vshll.u32 %v690, %v697
    %v700 = vshrl.u32 %v682, %v698
    %v701 = vor.u32 %v699, %v700
    %v702 = vsub.s32 4294967266, %v697
    %v703 = vadd.s32 %v702, 127
    %v704 = vshll.u32 %v703, 23
    %v705 = vor.u32 4788187, %v704
    %v706 = vand.u32 2147483647, %v705
    %v708 = vcvt.s32.f32 %v701
    %v709 = vmul.f32 %v708, %v706
    %v710 = vxor.u32 %v709, 2147483648
    %v711 = vsel %vm590, %v710, %v709
    %v712 = vsub.s32 4, %v688
    %v713 = vsel %vm590, %v712, %v688
    %v714 = vsel %vm589, %v109, %v711
    %v715 = vsel %vm589, 0, %v713
    %v716 = vmul.f32 %v714, %v714
    %v717 = vmul.f32 %v716, -0.001358992
    %v718 = vadd.f32 %v717, 0.041655596
    %v719 = vmul.f32 %v716, %v718
    %v720 = vadd.f32 %v719, -0.4999988
    %v721 = vmul.f32 %v716, %v720
    %v722 = vadd.f32 1.0, %v721
    %v723 = vmul.f32 %v714, %v714
    %v724 = vmul.f32 %v723, -0.00019511016
    %v725 = vadd.f32 %v724, 0.008332121
    %v726 = vmul.f32 %v723, %v725
    %v727 = vadd.f32 %v726, -0.16666654
    %v728 = vmul.f32 %v723, %v727
    %v729 = vadd.f32 %v728, 1.0
    %v730 = vmul.f32 %v729, %v714
    %vm731 = vweird.f32 %v109
    %v732 = vadd.s32 %v715, 3
    %v733 = vand.u32 %v732, 3
    %vm734 = vcmp.lt.s32.totalorder %v733, 2
    %vm735 = vcmp.eq.s32.totalorder %v733, 0
    %v736 = vxor.u32 %v730, 2147483648
    %v737 = vsel %vm735, %v722, %v736
    %vm738 = vcmp.eq.s32.totalorder %v733, 2
    %v739 = vxor.u32 %v722, 2147483648
    %v740 = vsel %vm738, %v739, %v730
    %v741 = vsel %vm734, %v737, %v740
    %v742 = vsel %vm731, nan, %v741
    %v743 = vand.u32 2147483647, %v112
    %vm744 = vcmp.le.f32.partialorder %v743, 0.7853982
    %vm745 = vcmp.lt.s32.totalorder %v112, 0
    %v746 = vand.u32 %v112, 2139095040
    %v747 = vshrl.u32 %v746, 23
    %v748 = vsub.s32 %v747, 127
    %v749 = vand.u32 2147483647, %v112
    %v750 = vand.u32 %v749, 8388607
    %v751 = vor.u32 %v750, 8388608
    %v752 = vsub.s32 0, %v751
    %v753 = vadd.s32 %v748, 1
    %vm754 = vcmp.gt.s32.totalorder %v753, 0
    %v755 = vsel %vm754, %v753, 0
    %v756 = vshrl.u32 %v755, 5
    %v757 = vand.u32 %v755, 31
    %v758 = vsub.s32 32, %v757
    %v759 = vshrl.u32 683565275, %v758
    %v760 = vshll.u32 683565275, %v757
    %v761 = vshrl.u32 2475754826, %v758
    %v762 = vor.u32 %v760, %v761
    %v763 = vshll.u32 2475754826, %v757
    %v764 = vshrl.u32 2131351028, %v758
    %v765 = vor.u32 %v763, %v764
    %v766 = vshll.u32 2131351028, %v757
    %v767 = vshrl.u32 2102212464, %v758
    %v768 = vor.u32 %v766, %v767
    %v769 = vshll.u32 2102212464, %v757
    %v770 = vshrl.u32 920167782, %v758
    %v771 = vor.u32 %v769, %v770
    %v772 = vshll.u32 920167782, %v757
    %v773 = vshrl.u32 1326507024, %v758
    %v774 = vor.u32 %v772, %v773
    %vm775 = vcmp.lt.s32.totalorder %v756, 1
    %vm776 = vcmp.lt.s32.totalorder %v756, 2
    %vm777 = vcmp.lt.s32.totalorder %v756, 3
    %vm778 = vcmp.lt.s32.totalorder %v756, 4
    %v779 = vsel %vm775, %v759, %v762
    %v780 = vsel %vm778, %v768, 2102212464
    %v781 = vsel %vm777, %v765, %v780
    %v782 = vsel %vm776, %v779, %v781
    %v783 = vsel %vm775, %v762, %v765
    %v784 = vsel %vm778, %v771, 920167782
    %v785 = vsel %vm777, %v768, %v784
    %v786 = vsel %vm776, %v783, %v785
    %v787 = vsel %vm775, %v765, %v768
    %v788 = vsel %vm778, %v774, 1326507024
    %v789 = vsel %vm777, %v771, %v788
    %v790 = vsel %vm776, %v787, %v789
    %v791 = vshll.u32 %v751, 8
    %v792 = vand.u32 %v791, 65535
    %v793 = vshrl.u32 %v791, 16
    %v794 = vand.u32 %v790, 65535
    %v795 = vshrl.u32 %v790, 16
    %v796 = vmul.u32 %v792, %v794
    %v797 = vmul.u32 %v792, %v795
    %v798 = vmul.u32 %v793, %v794
    %v799 = vmul.u32 %v793, %v795
    %v800 = vshll.u32 %v797, 16
    %v801 = vshrl.u32 %v797, 16
    %v802 = vshll.u32 %v798, 16
    %v803 = vshrl.u32 %v798, 16
    %vm804 = vc.u32 %v796, %v800
    %v805 = vsel %vm804, 1, 0
    %v806 = vadd.s32 %v796, %v800
    %v807 = vadd.s32 %v799, %v805
    %vm808 = vc.u32 %v806, %v802
    %v809 = vsel %vm808, 1, 0
    %v810 = vadd.s32 %v806, %v802
    %v811 = vadd.s32 %v807, %v809
    %v812 = vadd.s32 %v811, %v801
    %v813 = vadd.s32 %v812, %v803
    %v814 = vand.u32 %v791, 65535
    %v815 = vshrl.u32 %v791, 16
    %v816 = vand.u32 %v786, 65535
    %v817 = vshrl.u32 %v786, 16
    %v818 = vmul.u32 %v814, %v816
    %v819 = vmul.u32 %v814, %v817
    %v820 = vmul.u32 %v815, %v816
    %v821 = vmul.u32 %v815, %v817
    %v822 = vshll.u32 %v819, 16
    %v823 = vshrl.u32 %v819, 16
    %v824 = vshll.u32 %v820, 16
    %v825 = vshrl.u32 %v820, 16
    %vm826 = vc.u32 %v818, %v822
    %v827 = vsel %vm826, 1, 0
    %v828 = vadd.s32 %v818, %v822
    %v829 = vadd.s32 %v821, %v827
    %vm830 = vc.u32 %v828, %v824
    %v831 = vsel %vm830, 1, 0
    %v832 = vadd.s32 %v828, %v824
    %v833 = vadd.s32 %v829, %v831
    %v834 = vadd.s32 %v833, %v823
    %v835 = vadd.s32 %v834, %v825
    %v836 = vmul.u32 %v791, %v782
    %v837 = vadd.s32 %v813, %v832
    %vm838 = vc.u32 %v813, %v832
    %v839 = vadd.s32 %v835, 1
    %v840 = vsel %vm838, %v839, %v835
    %v841 = vadd.s32 %v836, %v840
    %v842 = vadd.s32 %v841, 536870912
    %v843 = vshrl.u32 %v842, 30
    %v844 = vshll.u32 %v843, 30
    %v845 = vsub.s32 %v841, %v844
    %vm846 = vcmp.lt.s32.totalorder %v845, 0
    %v847 = vsub.s32 0, %v845
    %v848 = vsel %vm846, %v847, %v845
    %v849 = vclz %v848
    %v850 = vsub.s32 %v849, 2
    %vm851 = vcmp.gt.s32.totalorder 0, %v850
    %v852 = vsel %vm851, 0, %v850
    %v853 = vsub.s32 32, %v852
    %v854 = vshll.u32 %v845, %v852
    %v855 = vshrl.u32 %v837, %v853
    %v856 = vor.u32 %v854, %v855
    %v857 = vsub.s32 4294967266, %v852
    %v858 = vadd.s32 %v857, 127
    %v859 = vshll.u32 %v858, 23
    %v860 = vor.u32 4788187, %v859
    %v861 = vand.u32 2147483647, %v860
    %v863 = vcvt.s32.f32 %v856
    %v864 = vmul.f32 %v863, %v861
    %v865 = vxor.u32 %v864, 2147483648
    %v866 = vsel %vm745, %v865, %v864
    %v867 = vsub.s32 4, %v843
    %v868 = vsel %vm745, %v867, %v843
    %v869 = vsel %vm744, %v112, %v866
    %v870 = vsel %vm744, 0, %v868
    %v871 = vmul.f32 %v869, %v869
    %v872 = vmul.f32 %v871, -0.001358992
    %v873 = vadd.f32 %v872, 0.041655596
    %v874 = vmul.f32 %v871, %v873
    %v875 = vadd.f32 %v874, -0.4999988
    %v876 = vmul.f32 %v871, %v875
    %v877 = vadd.f32 1.0, %v876
    %v878 = vmul.f32 %v869, %v869
    %v879 = vmul.f32 %v878, -0.00019511016
    %v880 = vadd.f32 %v879, 0.008332121
    %v881 = vmul.f32 %v878, %v880
    %v882 = vadd.f32 %v881, -0.16666654
    %v883 = vmul.f32 %v878, %v882
    %v884 = vadd.f32 %v883, 1.0
    %v885 = vmul.f32 %v884, %v869
    %vm886 = vweird.f32 %v112
    %v887 = vadd.s32 %v870, 3
    %v888 = vand.u32 %v887, 3
    %vm889 = vcmp.lt.s32.totalorder %v888, 2
    %vm890 = vcmp.eq.s32.totalorder %v888, 0
    %v891 = vxor.u32 %v885, 2147483648
    %v892 = vsel %vm890, %v877, %v891
    %vm893 = vcmp.eq.s32.totalorder %v888, 2
    %v894 = vxor.u32 %v877, 2147483648
    %v895 = vsel %vm893, %v894, %v885
    %v896 = vsel %vm889, %v892, %v895
    %v897 = vsel %vm886, nan, %v896
    %v898 = vand.u32 2147483647, %v115
    %vm899 = vcmp.le.f32.partialorder %v898, 0.7853982
    %vm900 = vcmp.lt.s32.totalorder %v115, 0
    %v901 = vand.u32 %v115, 2139095040
    %v902 = vshrl.u32 %v901, 23
    %v903 = vsub.s32 %v902, 127
    %v904 = vand.u32 2147483647, %v115
    %v905 = vand.u32 %v904, 8388607
    %v906 = vor.u32 %v905, 8388608
    %v907 = vsub.s32 0, %v906
    %v908 = vadd.s32 %v903, 1
    %vm909 = vcmp.gt.s32.totalorder %v908, 0
    %v910 = vsel %vm909, %v908, 0
    %v911 = vshrl.u32 %v910, 5
    %v912 = vand.u32 %v910, 31
    %v913 = vsub.s32 32, %v912
    %v914 = vshrl.u32 683565275, %v913
    %v915 = vshll.u32 683565275, %v912
    %v916 = vshrl.u32 2475754826, %v913
    %v917 = vor.u32 %v915, %v916
    %v918 = vshll.u32 2475754826, %v912
    %v919 = vshrl.u32 2131351028, %v913
    %v920 = vor.u32 %v918, %v919
    %v921 = vshll.u32 2131351028, %v912
    %v922 = vshrl.u32 2102212464, %v913
    %v923 = vor.u32 %v921, %v922
    %v924 = vshll.u32 2102212464, %v912
    %v925 = vshrl.u32 920167782, %v913
    %v926 = vor.u32 %v924, %v925
    %v927 = vshll.u32 920167782, %v912
    %v928 = vshrl.u32 1326507024, %v913
    %v929 = vor.u32 %v927, %v928
    %vm930 = vcmp.lt.s32.totalorder %v911, 1
    %vm931 = vcmp.lt.s32.totalorder %v911, 2
    %vm932 = vcmp.lt.s32.totalorder %v911, 3
    %vm933 = vcmp.lt.s32.totalorder %v911, 4
    %v934 = vsel %vm930, %v914, %v917
    %v935 = vsel %vm933, %v923, 2102212464
    %v936 = vsel %vm932, %v920, %v935
    %v937 = vsel %vm931, %v934, %v936
    %v938 = vsel %vm930, %v917, %v920
    %v939 = vsel %vm933, %v926, 920167782
    %v940 = vsel %vm932, %v923, %v939
    %v941 = vsel %vm931, %v938, %v940
    %v942 = vsel %vm930, %v920, %v923
    %v943 = vsel %vm933, %v929, 1326507024
    %v944 = vsel %vm932, %v926, %v943
    %v945 = vsel %vm931, %v942, %v944
    %v946 = vshll.u32 %v906, 8
    %v947 = vand.u32 %v946, 65535
    %v948 = vshrl.u32 %v946, 16
    %v949 = vand.u32 %v945, 65535
    %v950 = vshrl.u32 %v945, 16
    %v951 = vmul.u32 %v947, %v949
    %v952 = vmul.u32 %v947, %v950
    %v953 = vmul.u32 %v948, %v949
    %v954 = vmul.u32 %v948, %v950
    %v955 = vshll.u32 %v952, 16
    %v956 = vshrl.u32 %v952, 16
    %v957 = vshll.u32 %v953, 16
    %v958 = vshrl.u32 %v953, 16
    %vm959 = vc.u32 %v951, %v955
    %v960 = vsel %vm959, 1, 0
    %v961 = vadd.s32 %v951, %v955
    %v962 = vadd.s32 %v954, %v960
    %vm963 = vc.u32 %v961, %v957
    %v964 = vsel %vm963, 1, 0
    %v965 = vadd.s32 %v961, %v957
    %v966 = vadd.s32 %v962, %v964
    %v967 = vadd.s32 %v966, %v956
    %v968 = vadd.s32 %v967, %v958
    %v969 = vand.u32 %v946, 65535
    %v970 = vshrl.u32 %v946, 16
    %v971 = vand.u32 %v941, 65535
    %v972 = vshrl.u32 %v941, 16
    %v973 = vmul.u32 %v969, %v971
    %v974 = vmul.u32 %v969, %v972
    %v975 = vmul.u32 %v970, %v971
    %v976 = vmul.u32 %v970, %v972
    %v977 = vshll.u32 %v974, 16
    %v978 = vshrl.u32 %v974, 16
    %v979 = vshll.u32 %v975, 16
    %v980 = vshrl.u32 %v975, 16
    %vm981 = vc.u32 %v973, %v977
    %v982 = vsel %vm981, 1, 0
    %v983 = vadd.s32 %v973, %v977
    %v984 = vadd.s32 %v976, %v982
    %vm985 = vc.u32 %v983, %v979
    %v986 = vsel %vm985, 1, 0
    %v987 = vadd.s32 %v983, %v979
    %v988 = vadd.s32 %v984, %v986
    %v989 = vadd.s32 %v988, %v978
    %v990 = vadd.s32 %v989, %v980
    %v991 = vmul.u32 %v946, %v937
    %v992 = vadd.s32 %v968, %v987
    %vm993 = vc.u32 %v968, %v987
    %v994 = vadd.s32 %v990, 1
    %v995 = vsel %vm993, %v994, %v990
    %v996 = vadd.s32 %v991, %v995
    %v997 = vadd.s32 %v996, 536870912
    %v998 = vshrl.u32 %v997, 30
    %v999 = vshll.u32 %v998, 30
    %v1000 = vsub.s32 %v996, %v999
    %vm1001 = vcmp.lt.s32.totalorder %v1000, 0
    %v1002 = vsub.s32 0, %v1000
    %v1003 = vsel %vm1001, %v1002, %v1000
    %v1004 = vclz %v1003
    %v1005 = vsub.s32 %v1004, 2
    %vm1006 = vcmp.gt.s32.totalorder 0, %v1005
    %v1007 = vsel %vm1006, 0, %v1005
    %v1008 = vsub.s32 32, %v1007
    %v1009 = vshll.u32 %v1000, %v1007
    %v1010 = vshrl.u32 %v992, %v1008
    %v1011 = vor.u32 %v1009, %v1010
    %v1012 = vsub.s32 4294967266, %v1007
    %v1013 = vadd.s32 %v1012, 127
    %v1014 = vshll.u32 %v1013, 23
    %v1015 = vor.u32 4788187, %v1014
    %v1016 = vand.u32 2147483647, %v1015
    %v1018 = vcvt.s32.f32 %v1011
    %v1019 = vmul.f32 %v1018, %v1016
    %v1020 = vxor.u32 %v1019, 2147483648
    %v1021 = vsel %vm900, %v1020, %v1019
    %v1022 = vsub.s32 4, %v998
    %v1023 = vsel %vm900, %v1022, %v998
    %v1024 = vsel %vm899, %v115, %v1021
    %v1025 = vsel %vm899, 0, %v1023
    %v1026 = vmul.f32 %v1024, %v1024
    %v1027 = vmul.f32 %v1026, -0.001358992
    %v1028 = vadd.f32 %v1027, 0.041655596
    %v1029 = vmul.f32 %v1026, %v1028
    %v1030 = vadd.f32 %v1029, -0.4999988
    %v1031 = vmul.f32 %v1026, %v1030
    %v1032 = vadd.f32 1.0, %v1031
    %v1033 = vmul.f32 %v1024, %v1024
    %v1034 = vmul.f32 %v1033, -0.00019511016
    %v1035 = vadd.f32 %v1034, 0.008332121
    %v1036 = vmul.f32 %v1033, %v1035
    %v1037 = vadd.f32 %v1036, -0.16666654
    %v1038 = vmul.f32 %v1033, %v1037
    %v1039 = vadd.f32 %v1038, 1.0
    %v1040 = vmul.f32 %v1039, %v1024
    %vm1041 = vweird.f32 %v115
    %v1042 = vadd.s32 %v1025, 3
    %v1043 = vand.u32 %v1042, 3
    %vm1044 = vcmp.lt.s32.totalorder %v1043, 2
    %vm1045 = vcmp.eq.s32.totalorder %v1043, 0
    %v1046 = vxor.u32 %v1040, 2147483648
    %v1047 = vsel %vm1045, %v1032, %v1046
    %vm1048 = vcmp.eq.s32.totalorder %v1043, 2
    %v1049 = vxor.u32 %v1032, 2147483648
    %v1050 = vsel %vm1048, %v1049, %v1040
    %v1051 = vsel %vm1044, %v1047, %v1050
    %v1052 = vsel %vm1041, nan, %v1051
    %v1053 = vand.u32 2147483647, %v118
    %vm1054 = vcmp.le.f32.partialorder %v1053, 0.7853982
    %vm1055 = vcmp.lt.s32.totalorder %v118, 0
    %v1056 = vand.u32 %v118, 2139095040
    %v1057 = vshrl.u32 %v1056, 23
    %v1058 = vsub.s32 %v1057, 127
    %v1059 = vand.u32 2147483647, %v118
    %v1060 = vand.u32 %v1059, 8388607
    %v1061 = vor.u32 %v1060, 8388608
    %v1062 = vsub.s32 0, %v1061
    %v1063 = vadd.s32 %v1058, 1
    %vm1064 = vcmp.gt.s32.totalorder %v1063, 0
    %v1065 = vsel %vm1064, %v1063, 0
    %v1066 = vshrl.u32 %v1065, 5
    %v1067 = vand.u32 %v1065, 31
    %v1068 = vsub.s32 32, %v1067
    %v1069 = vshrl.u32 683565275, %v1068
    %v1070 = vshll.u32 683565275, %v1067
    %v1071 = vshrl.u32 2475754826, %v1068
    %v1072 = vor.u32 %v1070, %v1071
    %v1073 = vshll.u32 2475754826, %v1067
    %v1074 = vshrl.u32 2131351028, %v1068
    %v1075 = vor.u32 %v1073, %v1074
    %v1076 = vshll.u32 2131351028, %v1067
    %v1077 = vshrl.u32 2102212464, %v1068
    %v1078 = vor.u32 %v1076, %v1077
    %v1079 = vshll.u32 2102212464, %v1067
    %v1080 = vshrl.u32 920167782, %v1068
    %v1081 = vor.u32 %v1079, %v1080
    %v1082 = vshll.u32 920167782, %v1067
    %v1083 = vshrl.u32 1326507024, %v1068
    %v1084 = vor.u32 %v1082, %v1083
    %vm1085 = vcmp.lt.s32.totalorder %v1066, 1
    %vm1086 = vcmp.lt.s32.totalorder %v1066, 2
    %vm1087 = vcmp.lt.s32.totalorder %v1066, 3
    %vm1088 = vcmp.lt.s32.totalorder %v1066, 4
    %v1089 = vsel %vm1085, %v1069, %v1072
    %v1090 = vsel %vm1088, %v1078, 2102212464
    %v1091 = vsel %vm1087, %v1075, %v1090
    %v1092 = vsel %vm1086, %v1089, %v1091
    %v1093 = vsel %vm1085, %v1072, %v1075
    %v1094 = vsel %vm1088, %v1081, 920167782
    %v1095 = vsel %vm1087, %v1078, %v1094
    %v1096 = vsel %vm1086, %v1093, %v1095
    %v1097 = vsel %vm1085, %v1075, %v1078
    %v1098 = vsel %vm1088, %v1084, 1326507024
    %v1099 = vsel %vm1087, %v1081, %v1098
    %v1100 = vsel %vm1086, %v1097, %v1099
    %v1101 = vshll.u32 %v1061, 8
    %v1102 = vand.u32 %v1101, 65535
    %v1103 = vshrl.u32 %v1101, 16
    %v1104 = vand.u32 %v1100, 65535
    %v1105 = vshrl.u32 %v1100, 16
    %v1106 = vmul.u32 %v1102, %v1104
    %v1107 = vmul.u32 %v1102, %v1105
    %v1108 = vmul.u32 %v1103, %v1104
    %v1109 = vmul.u32 %v1103, %v1105
    %v1110 = vshll.u32 %v1107, 16
    %v1111 = vshrl.u32 %v1107, 16
    %v1112 = vshll.u32 %v1108, 16
    %v1113 = vshrl.u32 %v1108, 16
    %vm1114 = vc.u32 %v1106, %v1110
    %v1115 = vsel %vm1114, 1, 0
    %v1116 = vadd.s32 %v1106, %v1110
    %v1117 = vadd.s32 %v1109, %v1115
    %vm1118 = vc.u32 %v1116, %v1112
    %v1119 = vsel %vm1118, 1, 0
    %v1120 = vadd.s32 %v1116, %v1112
    %v1121 = vadd.s32 %v1117, %v1119
    %v1122 = vadd.s32 %v1121, %v1111
    %v1123 = vadd.s32 %v1122, %v1113
    %v1124 = vand.u32 %v1101, 65535
    %v1125 = vshrl.u32 %v1101, 16
    %v1126 = vand.u32 %v1096, 65535
    %v1127 = vshrl.u32 %v1096, 16
    %v1128 = vmul.u32 %v1124, %v1126
    %v1129 = vmul.u32 %v1124, %v1127
    %v1130 = vmul.u32 %v1125, %v1126
    %v1131 = vmul.u32 %v1125, %v1127
    %v1132 = vshll.u32 %v1129, 16
    %v1133 = vshrl.u32 %v1129, 16
    %v1134 = vshll.u32 %v1130, 16
    %v1135 = vshrl.u32 %v1130, 16
    %vm1136 = vc.u32 %v1128, %v1132
    %v1137 = vsel %vm1136, 1, 0
    %v1138 = vadd.s32 %v1128, %v1132
    %v1139 = vadd.s32 %v1131, %v1137
    %vm1140 = vc.u32 %v1138, %v1134
    %v1141 = vsel %vm1140, 1, 0
    %v1142 = vadd.s32 %v1138, %v1134
    %v1143 = vadd.s32 %v1139, %v1141
    %v1144 = vadd.s32 %v1143, %v1133
    %v1145 = vadd.s32 %v1144, %v1135
    %v1146 = vmul.u32 %v1101, %v1092
    %v1147 = vadd.s32 %v1123, %v1142
    %vm1148 = vc.u32 %v1123, %v1142
    %v1149 = vadd.s32 %v1145, 1
    %v1150 = vsel %vm1148, %v1149, %v1145
    %v1151 = vadd.s32 %v1146, %v1150
    %v1152 = vadd.s32 %v1151, 536870912
    %v1153 = vshrl.u32 %v1152, 30
    %v1154 = vshll.u32 %v1153, 30
    %v1155 = vsub.s32 %v1151, %v1154
    %vm1156 = vcmp.lt.s32.totalorder %v1155, 0
    %v1157 = vsub.s32 0, %v1155
    %v1158 = vsel %vm1156, %v1157, %v1155
    %v1159 = vclz %v1158
    %v1160 = vsub.s32 %v1159, 2
    %vm1161 = vcmp.gt.s32.totalorder 0, %v1160
    %v1162 = vsel %vm1161, 0, %v1160
    %v1163 = vsub.s32 32, %v1162
    %v1164 = vshll.u32 %v1155, %v1162
    %v1165 = vshrl.u32 %v1147, %v1163
    %v1166 = vor.u32 %v1164, %v1165
    %v1167 = vsub.s32 4294967266, %v1162
    %v1168 = vadd.s32 %v1167, 127
    %v1169 = vshll.u32 %v1168, 23
    %v1170 = vor.u32 4788187, %v1169
    %v1171 = vand.u32 2147483647, %v1170
    %v1173 = vcvt.s32.f32 %v1166
    %v1174 = vmul.f32 %v1173, %v1171
    %v1175 = vxor.u32 %v1174, 2147483648
    %v1176 = vsel %vm1055, %v1175, %v1174
    %v1177 = vsub.s32 4, %v1153
    %v1178 = vsel %vm1055, %v1177, %v1153
    %v1179 = vsel %vm1054, %v118, %v1176
    %v1180 = vsel %vm1054, 0, %v1178
    %v1181 = vmul.f32 %v1179, %v1179
    %v1182 = vmul.f32 %v1181, -0.001358992
    %v1183 = vadd.f32 %v1182, 0.041655596
    %v1184 = vmul.f32 %v1181, %v1183
    %v1185 = vadd.f32 %v1184, -0.4999988
    %v1186 = vmul.f32 %v1181, %v1185
    %v1187 = vadd.f32 1.0, %v1186
    %v1188 = vmul.f32 %v1179, %v1179
    %v1189 = vmul.f32 %v1188, -0.00019511016
    %v1190 = vadd.f32 %v1189, 0.008332121
    %v1191 = vmul.f32 %v1188, %v1190
    %v1192 = vadd.f32 %v1191, -0.16666654
    %v1193 = vmul.f32 %v1188, %v1192
    %v1194 = vadd.f32 %v1193, 1.0
    %v1195 = vmul.f32 %v1194, %v1179
    %vm1196 = vweird.f32 %v118
    %v1197 = vadd.s32 %v1180, 3
    %v1198 = vand.u32 %v1197, 3
    %vm1199 = vcmp.lt.s32.totalorder %v1198, 2
    %vm1200 = vcmp.eq.s32.totalorder %v1198, 0
    %v1201 = vxor.u32 %v1195, 2147483648
    %v1202 = vsel %vm1200, %v1187, %v1201
    %vm1203 = vcmp.eq.s32.totalorder %v1198, 2
    %v1204 = vxor.u32 %v1187, 2147483648
    %v1205 = vsel %vm1203, %v1204, %v1195
    %v1206 = vsel %vm1199, %v1202, %v1205
    %v1207 = vsel %vm1196, nan, %v1206
    %v1208 = vand.u32 2147483647, %v121
    %vm1209 = vcmp.le.f32.partialorder %v1208, 0.7853982
    %vm1210 = vcmp.lt.s32.totalorder %v121, 0
    %v1211 = vand.u32 %v121, 2139095040
    %v1212 = vshrl.u32 %v1211, 23
    %v1213 = vsub.s32 %v1212, 127
    %v1214 = vand.u32 2147483647, %v121
    %v1215 = vand.u32 %v1214, 8388607
    %v1216 = vor.u32 %v1215, 8388608
    %v1217 = vsub.s32 0, %v1216
    %v1218 = vadd.s32 %v1213, 1
    %vm1219 = vcmp.gt.s32.totalorder %v1218, 0
    %v1220 = vsel %vm1219, %v1218, 0
    %v1221 = vshrl.u32 %v1220, 5
    %v1222 = vand.u32 %v1220, 31
    %v1223 = vsub.s32 32, %v1222
    %v1224 = vshrl.u32 683565275, %v1223
    %v1225 = vshll.u32 683565275, %v1222
    %v1226 = vshrl.u32 2475754826, %v1223
    %v1227 = vor.u32 %v1225, %v1226
    %v1228 = vshll.u32 2475754826, %v1222
    %v1229 = vshrl.u32 2131351028, %v1223
    %v1230 = vor.u32 %v1228, %v1229
    %v1231 = vshll.u32 2131351028, %v1222
    %v1232 = vshrl.u32 2102212464, %v1223
    %v1233 = vor.u32 %v1231, %v1232
    %v1234 = vshll.u32 2102212464, %v1222
    %v1235 = vshrl.u32 920167782, %v1223
    %v1236 = vor.u32 %v1234, %v1235
    %v1237 = vshll.u32 920167782, %v1222
    %v1238 = vshrl.u32 1326507024, %v1223
    %v1239 = vor.u32 %v1237, %v1238
    %vm1240 = vcmp.lt.s32.totalorder %v1221, 1
    %vm1241 = vcmp.lt.s32.totalorder %v1221, 2
    %vm1242 = vcmp.lt.s32.totalorder %v1221, 3
    %vm1243 = vcmp.lt.s32.totalorder %v1221, 4
    %v1244 = vsel %vm1240, %v1224, %v1227
    %v1245 = vsel %vm1243, %v1233, 2102212464
    %v1246 = vsel %vm1242, %v1230, %v1245
    %v1247 = vsel %vm1241, %v1244, %v1246
    %v1248 = vsel %vm1240, %v1227, %v1230
    %v1249 = vsel %vm1243, %v1236, 920167782
    %v1250 = vsel %vm1242, %v1233, %v1249
    %v1251 = vsel %vm1241, %v1248, %v1250
    %v1252 = vsel %vm1240, %v1230, %v1233
    %v1253 = vsel %vm1243, %v1239, 1326507024
    %v1254 = vsel %vm1242, %v1236, %v1253
    %v1255 = vsel %vm1241, %v1252, %v1254
    %v1256 = vshll.u32 %v1216, 8
    %v1257 = vand.u32 %v1256, 65535
    %v1258 = vshrl.u32 %v1256, 16
    %v1259 = vand.u32 %v1255, 65535
    %v1260 = vshrl.u32 %v1255, 16
    %v1261 = vmul.u32 %v1257, %v1259
    %v1262 = vmul.u32 %v1257, %v1260
    %v1263 = vmul.u32 %v1258, %v1259
    %v1264 = vmul.u32 %v1258, %v1260
    %v1265 = vshll.u32 %v1262, 16
    %v1266 = vshrl.u32 %v1262, 16
    %v1267 = vshll.u32 %v1263, 16
    %v1268 = vshrl.u32 %v1263, 16
    %vm1269 = vc.u32 %v1261, %v1265
    %v1270 = vsel %vm1269, 1, 0
    %v1271 = vadd.s32 %v1261, %v1265
    %v1272 = vadd.s32 %v1264, %v1270
    %vm1273 = vc.u32 %v1271, %v1267
    %v1274 = vsel %vm1273, 1, 0
    %v1275 = vadd.s32 %v1271, %v1267
    %v1276 = vadd.s32 %v1272, %v1274
    %v1277 = vadd.s32 %v1276, %v1266
    %v1278 = vadd.s32 %v1277, %v1268
    %v1279 = vand.u32 %v1256, 65535
    %v1280 = vshrl.u32 %v1256, 16
    %v1281 = vand.u32 %v1251, 65535
    %v1282 = vshrl.u32 %v1251, 16
    %v1283 = vmul.u32 %v1279, %v1281
    %v1284 = vmul.u32 %v1279, %v1282
    %v1285 = vmul.u32 %v1280, %v1281
    %v1286 = vmul.u32 %v1280, %v1282
    %v1287 = vshll.u32 %v1284, 16
    %v1288 = vshrl.u32 %v1284, 16
    %v1289 = vshll.u32 %v1285, 16
    %v1290 = vshrl.u32 %v1285, 16
    %vm1291 = vc.u32 %v1283, %v1287
    %v1292 = vsel %vm1291, 1, 0
    %v1293 = vadd.s32 %v1283, %v1287
    %v1294 = vadd.s32 %v1286, %v1292
    %vm1295 = vc.u32 %v1293, %v1289
    %v1296 = vsel %vm1295, 1, 0
    %v1297 = vadd.s32 %v1293, %v1289
    %v1298 = vadd.s32 %v1294, %v1296
    %v1299 = vadd.s32 %v1298, %v1288
    %v1300 = vadd.s32 %v1299, %v1290
    %v1301 = vmul.u32 %v1256, %v1247
    %v1302 = vadd.s32 %v1278, %v1297
    %vm1303 = vc.u32 %v1278, %v1297
    %v1304 = vadd.s32 %v1300, 1
    %v1305 = vsel %vm1303, %v1304, %v1300
    %v1306 = vadd.s32 %v1301, %v1305
    %v1307 = vadd.s32 %v1306, 536870912
    %v1308 = vshrl.u32 %v1307, 30
    %v1309 = vshll.u32 %v1308, 30
    %v1310 = vsub.s32 %v1306, %v1309
    %vm1311 = vcmp.lt.s32.totalorder %v1310, 0
    %v1312 = vsub.s32 0, %v1310
    %v1313 = vsel %vm1311, %v1312, %v1310
    %v1314 = vclz %v1313
    %v1315 = vsub.s32 %v1314, 2
    %vm1316 = vcmp.gt.s32.totalorder 0, %v1315
    %v1317 = vsel %vm1316, 0, %v1315
    %v1318 = vsub.s32 32, %v1317
    %v1319 = vshll.u32 %v1310, %v1317
    %v1320 = vshrl.u32 %v1302, %v1318
    %v1321 = vor.u32 %v1319, %v1320
    %v1322 = vsub.s32 4294967266, %v1317
    %v1323 = vadd.s32 %v1322, 127
    %v1324 = vshll.u32 %v1323, 23
    %v1325 = vor.u32 4788187, %v1324
    %v1326 = vand.u32 2147483647, %v1325
    %v1328 = vcvt.s32.f32 %v1321
    %v1329 = vmul.f32 %v1328, %v1326
    %v1330 = vxor.u32 %v1329, 2147483648
    %v1331 = vsel %vm1210, %v1330, %v1329
    %v1332 = vsub.s32 4, %v1308
    %v1333 = vsel %vm1210, %v1332, %v1308
    %v1334 = vsel %vm1209, %v121, %v1331
    %v1335 = vsel %vm1209, 0, %v1333
    %v1336 = vmul.f32 %v1334, %v1334
    %v1337 = vmul.f32 %v1336, -0.001358992
    %v1338 = vadd.f32 %v1337, 0.041655596
    %v1339 = vmul.f32 %v1336, %v1338
    %v1340 = vadd.f32 %v1339, -0.4999988
    %v1341 = vmul.f32 %v1336, %v1340
    %v1342 = vadd.f32 1.0, %v1341
    %v1343 = vmul.f32 %v1334, %v1334
    %v1344 = vmul.f32 %v1343, -0.00019511016
    %v1345 = vadd.f32 %v1344, 0.008332121
    %v1346 = vmul.f32 %v1343, %v1345
    %v1347 = vadd.f32 %v1346, -0.16666654
    %v1348 = vmul.f32 %v1343, %v1347
    %v1349 = vadd.f32 %v1348, 1.0
    %v1350 = vmul.f32 %v1349, %v1334
    %vm1351 = vweird.f32 %v121
    %v1352 = vadd.s32 %v1335, 3
    %v1353 = vand.u32 %v1352, 3
    %vm1354 = vcmp.lt.s32.totalorder %v1353, 2
    %vm1355 = vcmp.eq.s32.totalorder %v1353, 0
    %v1356 = vxor.u32 %v1350, 2147483648
    %v1357 = vsel %vm1355, %v1342, %v1356
    %vm1358 = vcmp.eq.s32.totalorder %v1353, 2
    %v1359 = vxor.u32 %v1342, 2147483648
    %v1360 = vsel %vm1358, %v1359, %v1350
    %v1361 = vsel %vm1354, %v1357, %v1360
    %v1362 = vsel %vm1351, nan, %v1361
    %v1363 = vld [vmem:[#allocation2 + $0x10] sm:$0xff]
    %v1364 = vld [vmem:[#allocation2 + $0x18] sm:$0xff]
    %v1365 = vld [vmem:[#allocation2 + $0x20] sm:$0xff]
    %v1366 = vld [vmem:[#allocation2 + $0x28] sm:$0xff]
    %v1367 = vld [vmem:[#allocation2 + $0x30] sm:$0xff]
    %v1368 = vld [vmem:[#allocation2 + $0x38] sm:$0xff]
    %v1369 = vld [vmem:[#allocation2 + $0x40] sm:$0xff]
    %v1370 = vld [vmem:[#allocation2 + $0x48] sm:$0xff]
    %v1371 = vld [vmem:[#allocation2 + $0x50] sm:$0xff]
    %v1372 = vld [vmem:[#allocation2 + $0x58] sm:$0xff]
    %v1373 = vld [vmem:[#allocation2 + $0x60] sm:$0xff]
    %v1374 = vld [vmem:[#allocation2 + $0x68] sm:$0xff]
    %v1375 = vld [vmem:[#allocation2 + $0x70] sm:$0xff]
    %v1376 = vld [vmem:[#allocation2 + $0x78] sm:$0xff]
    %v1377 = vld [vmem:[#allocation2 + $0x80] sm:$0xff]
    %v1378 = vld [vmem:[#allocation2 + $0x88] sm:$0xff]
    %v1379 = vld [vmem:[#allocation2 + $0x8] sm:$0xff]
    %1380 = vmatpush.msra.mxu0 0.0
    %1381 = vmatpush.msra.mxu0 0.0
    %1382 = vmatpush.msra.mxu0 0.0
    %1383 = vmatpush.msra.mxu0 0.0
    %1384 = vmatpush.msra.mxu0 0.0
    %1385 = vmatpush.msra.mxu0 0.0
    %1386 = vmatpush.msra.mxu0 0.0
    %1387 = vmatpush.msra.mxu0 0.0
    %1388 = vmatpush.msra.mxu0 0.0
    %1389 = vmatpush.msra.mxu0 0.0
    %1390 = vmatpush.msra.mxu0 0.0
    %1391 = vmatpush.msra.mxu0 0.0
    %1392 = vmatpush.msra.mxu0 0.0
    %1393 = vmatpush.msra.mxu0 0.0
    %1394 = vmatpush.msra.mxu0 0.0
    %1395 = vmatpush.msra.mxu0 %v1379
    %1396 = vmatmul.f32.gmra.mxu0 %v59
    %v1397 = vpop.f32.mrf.mxu0
    %v1398 = vadd.f32 0.0, %v1397
    %1399 = vmatmul.f32.gmra.mxu0 %v62
    %v1400 = vpop.f32.mrf.mxu0
    %v1401 = vadd.f32 0.0, %v1400
    %1402 = vmatmul.f32.gmra.mxu0 %v65
    %v1403 = vpop.f32.mrf.mxu0
    %v1404 = vadd.f32 0.0, %v1403
    %1405 = vmatmul.f32.gmra.mxu0 %v68
    %v1406 = vpop.f32.mrf.mxu0
    %v1407 = vadd.f32 0.0, %v1406
    %1408 = vmatmul.f32.gmra.mxu0 %v71
    %v1409 = vpop.f32.mrf.mxu0
    %v1410 = vadd.f32 0.0, %v1409
    %1411 = vmatmul.f32.gmra.mxu0 %v74
    %v1412 = vpop.f32.mrf.mxu0
    %v1413 = vadd.f32 0.0, %v1412
    %1414 = vmatmul.f32.gmra.mxu0 %v77
    %v1415 = vpop.f32.mrf.mxu0
    %v1416 = vadd.f32 0.0, %v1415
    %1417 = vmatmul.f32.gmra.mxu0 %v80
    %v1418 = vpop.f32.mrf.mxu0
    %v1419 = vadd.f32 0.0, %v1418
    %1420 = vdwg.mxu0
    %1421 = vmatpush.msra.mxu0 %v1378
    %1422 = vmatpush.msra.mxu0 %v1377
    %1423 = vmatpush.msra.mxu0 %v1376
    %1424 = vmatpush.msra.mxu0 %v1375
    %1425 = vmatpush.msra.mxu0 %v1374
    %1426 = vmatpush.msra.mxu0 %v1373
    %1427 = vmatpush.msra.mxu0 %v1372
    %1428 = vmatpush.msra.mxu0 %v1371
    %1429 = vmatpush.msra.mxu0 %v1370
    %1430 = vmatpush.msra.mxu0 %v1369
    %1431 = vmatpush.msra.mxu0 %v1368
    %1432 = vmatpush.msra.mxu0 %v1367
    %1433 = vmatpush.msra.mxu0 %v1366
    %1434 = vmatpush.msra.mxu0 %v1365
    %1435 = vmatpush.msra.mxu0 %v1364
    %1436 = vmatpush.msra.mxu0 %v1363
    %1437 = vmatmul.f32.gmra.mxu0 %v277
    %v1438 = vpop.f32.mrf.mxu0
    %v1439 = vadd.f32 %v1398, %v1438
    %1440 = vmatmul.f32.gmra.mxu0 %v432
    %v1441 = vpop.f32.mrf.mxu0
    %v1442 = vadd.f32 %v1401, %v1441
    %1443 = vmatmul.f32.gmra.mxu0 %v587
    %v1444 = vpop.f32.mrf.mxu0
    %v1445 = vadd.f32 %v1404, %v1444
    %1446 = vmatmul.f32.gmra.mxu0 %v742
    %v1447 = vpop.f32.mrf.mxu0
    %v1448 = vadd.f32 %v1407, %v1447
    %1449 = vmatmul.f32.gmra.mxu0 %v897
    %v1450 = vpop.f32.mrf.mxu0
    %v1451 = vadd.f32 %v1410, %v1450
    %1452 = vmatmul.f32.gmra.mxu0 %v1052
    %v1453 = vpop.f32.mrf.mxu0
    %v1454 = vadd.f32 %v1413, %v1453
    %1455 = vmatmul.f32.gmra.mxu0 %v1207
    %v1456 = vpop.f32.mrf.mxu0
    %v1457 = vadd.f32 %v1416, %v1456
    %1458 = vmatmul.f32.gmra.mxu0 %v1362
    %v1459 = vpop.f32.mrf.mxu0
    %v1460 = vadd.f32 %v1419, %v1459
    %1461 = vdwg.mxu0
    %v1462 = vld [vmem:[#allocation2 + $0xd8] sm:$0x1]
    %v1463 = vperm.slane %v1462, 0
    %v1464 = vadd.f32 %v1439, %v1463
    %v1465 = vadd.f32 %v1442, %v1463
    %v1466 = vadd.f32 %v1445, %v1463
    %v1467 = vadd.f32 %v1448, %v1463
    %v1468 = vadd.f32 %v1451, %v1463
    %v1469 = vadd.f32 %v1454, %v1463
    %v1470 = vadd.f32 %v1457, %v1463
    %v1471 = vadd.f32 %v1460, %v1463
    %v1472 = vld [vmem:[#allocation2 + $0x90] sm:$0xff]
    %v1473 = vld [vmem:[#allocation2 + $0x98] sm:$0xff]
    %v1474 = vld [vmem:[#allocation2 + $0xa0] sm:$0xff]
    %v1475 = vld [vmem:[#allocation2 + $0xa8] sm:$0xff]
    %vm1476 = vcmask 261120
    %v1478 = vsel %vm1476, 0.0, 0
    %1480 = vmatpush.msra.mxu0 0.0
    %1481 = vmatpush.msra.mxu0 0.0
    %1482 = vmatpush.msra.mxu0 0.0
    %1483 = vmatpush.msra.mxu0 0.0
    %1484 = vmatpush.msra.mxu0 0.0
    %1485 = vmatpush.msra.mxu0 0.0
    %1486 = vmatpush.msra.mxu0 0.0
    %1487 = vmatpush.msra.mxu0 0.0
    %1488 = vmatpush.msra.mxu0 0.0
    %1489 = vmatpush.msra.mxu0 0.0
    %1490 = vmatpush.msra.mxu0 0.0
    %1491 = vmatpush.msra.mxu0 0.0
    %1492 = vmatpush.msra.mxu0 %v1475
    %1493 = vmatpush.msra.mxu0 %v1474
    %1494 = vmatpush.msra.mxu0 %v1473
    %1495 = vmatpush.msra.mxu0 %v1472
    %1496 = vmatmul.f32.gmra.mxu0 %v1478
    %v1497 = vpop.f32.mrf.mxu0
    %v1498 = vadd.f32 0.0, %v1497
    %1499 = vdwg.mxu0
    %v1500 = vadd.f32 %v1464, %v1498
    %v1501 = vtanh.pop %v1500
    %v1502 = vadd.f32 %v1501, 1.0
    %v1503 = vmul.f32 %v1502, 0.5
    %v1504 = vmul.f32 %v1503, 0.0
    %1506 = vrot.lane.b32.xlu0 %v1501, 64
    %v1507 = vpop.permute.xlu0 %1506
    %v1509 = vmul.f32 %v1503, %v1507
    %1511 = vrot.lane.b32.xlu0 %v1509, 32
    %v1512 = vpop.permute.xlu0 %1511
    %v1514 = vadd.f32 %v1504, %v1512
    %v1515 = vtanh.pop %v1514
    %1517 = vrot.lane.b32.xlu0 %v1515, 64
    %v1518 = vpop.permute.xlu0 %1517
    %v1520 = vmul.f32 %v1503, %v1518
    %1522 = vrot.lane.b32.xlu0 %v1520, 32
    %v1523 = vpop.permute.xlu0 %1522
    %v1524 = vsel %vm1476, %v1523, 0
    %1526 = vmatpush.msra.mxu0 0.0
    %1527 = vmatpush.msra.mxu0 0.0
    %1528 = vmatpush.msra.mxu0 0.0
    %1529 = vmatpush.msra.mxu0 0.0
    %1530 = vmatpush.msra.mxu0 0.0
    %1531 = vmatpush.msra.mxu0 0.0
    %1532 = vmatpush.msra.mxu0 0.0
    %1533 = vmatpush.msra.mxu0 0.0
    %1534 = vmatpush.msra.mxu0 0.0
    %1535 = vmatpush.msra.mxu0 0.0
    %1536 = vmatpush.msra.mxu0 0.0
    %1537 = vmatpush.msra.mxu0 0.0
    %1538 = vmatpush.msra.mxu0 %v1475
    %1539 = vmatpush.msra.mxu0 %v1474
    %1540 = vmatpush.msra.mxu0 %v1473
    %1541 = vmatpush.msra.mxu0 %v1472
    %1542 = vmatmul.f32.gmra.mxu0 %v1524
    %v1543 = vpop.f32.mrf.mxu0
    %v1544 = vadd.f32 0.0, %v1543
    %1545 = vdwg.mxu0
    %v1546 = vadd.f32 %v1465, %v1544
    %v1547 = vtanh.pop %v1546
    %v1548 = vadd.f32 %v1547, 1.0
    %v1549 = vmul.f32 %v1548, 0.5
    %v1550 = vmul.f32 %v1549, %v1514
    %1552 = vrot.lane.b32.xlu0 %v1547, 64
    %v1553 = vpop.permute.xlu0 %1552
    %v1555 = vmul.f32 %v1549, %v1553
    %1557 = vrot.lane.b32.xlu0 %v1555, 32
    %v1558 = vpop.permute.xlu0 %1557
    %v1560 = vadd.f32 %v1550, %v1558
    %v1561 = vtanh.pop %v1560
    %1563 = vrot.lane.b32.xlu0 %v1561, 64
    %v1564 = vpop.permute.xlu0 %1563
    %v1566 = vmul.f32 %v1549, %v1564
    %1568 = vrot.lane.b32.xlu0 %v1566, 32
    %v1569 = vpop.permute.xlu0 %1568
    %v1570 = vsel %vm1476, %v1569, 0
    %1572 = vmatpush.msra.mxu0 0.0
    %1573 = vmatpush.msra.mxu0 0.0
    %1574 = vmatpush.msra.mxu0 0.0
    %1575 = vmatpush.msra.mxu0 0.0
    %1576 = vmatpush.msra.mxu0 0.0
    %1577 = vmatpush.msra.mxu0 0.0
    %1578 = vmatpush.msra.mxu0 0.0
    %1579 = vmatpush.msra.mxu0 0.0
    %1580 = vmatpush.msra.mxu0 0.0
    %1581 = vmatpush.msra.mxu0 0.0
    %1582 = vmatpush.msra.mxu0 0.0
    %1583 = vmatpush.msra.mxu0 0.0
    %1584 = vmatpush.msra.mxu0 %v1475
    %1585 = vmatpush.msra.mxu0 %v1474
    %1586 = vmatpush.msra.mxu0 %v1473
    %1587 = vmatpush.msra.mxu0 %v1472
    %1588 = vmatmul.f32.gmra.mxu0 %v1570
    %v1589 = vpop.f32.mrf.mxu0
    %v1590 = vadd.f32 0.0, %v1589
    %1591 = vdwg.mxu0
    %v1592 = vadd.f32 %v1466, %v1590
    %v1593 = vtanh.pop %v1592
    %v1594 = vadd.f32 %v1593, 1.0
    %v1595 = vmul.f32 %v1594, 0.5
    %v1596 = vmul.f32 %v1595, %v1560
    %1598 = vrot.lane.b32.xlu0 %v1593, 64
    %v1599 = vpop.permute.xlu0 %1598
    %v1601 = vmul.f32 %v1595, %v1599
    %1603 = vrot.lane.b32.xlu0 %v1601, 32
    %v1604 = vpop.permute.xlu0 %1603
    %v1606 = vadd.f32 %v1596, %v1604
    %v1607 = vtanh.pop %v1606
    %1609 = vrot.lane.b32.xlu0 %v1607, 64
    %v1610 = vpop.permute.xlu0 %1609
    %v1612 = vmul.f32 %v1595, %v1610
    %1614 = vrot.lane.b32.xlu0 %v1612, 32
    %v1615 = vpop.permute.xlu0 %1614
    %v1616 = vsel %vm1476, %v1615, 0
    %1618 = vmatpush.msra.mxu0 0.0
    %1619 = vmatpush.msra.mxu0 0.0
    %1620 = vmatpush.msra.mxu0 0.0
    %1621 = vmatpush.msra.mxu0 0.0
    %1622 = vmatpush.msra.mxu0 0.0
    %1623 = vmatpush.msra.mxu0 0.0
    %1624 = vmatpush.msra.mxu0 0.0
    %1625 = vmatpush.msra.mxu0 0.0
    %1626 = vmatpush.msra.mxu0 0.0
    %1627 = vmatpush.msra.mxu0 0.0
    %1628 = vmatpush.msra.mxu0 0.0
    %1629 = vmatpush.msra.mxu0 0.0
    %1630 = vmatpush.msra.mxu0 %v1475
    %1631 = vmatpush.msra.mxu0 %v1474
    %1632 = vmatpush.msra.mxu0 %v1473
    %1633 = vmatpush.msra.mxu0 %v1472
    %1634 = vmatmul.f32.gmra.mxu0 %v1616
    %v1635 = vpop.f32.mrf.mxu0
    %v1636 = vadd.f32 0.0, %v1635
    %1637 = vdwg.mxu0
    %v1638 = vadd.f32 %v1467, %v1636
    %v1639 = vtanh.pop %v1638
    %v1640 = vadd.f32 %v1639, 1.0
    %v1641 = vmul.f32 %v1640, 0.5
    %v1642 = vmul.f32 %v1641, %v1606
    %1644 = vrot.lane.b32.xlu0 %v1639, 64
    %v1645 = vpop.permute.xlu0 %1644
    %v1647 = vmul.f32 %v1641, %v1645
    %1649 = vrot.lane.b32.xlu0 %v1647, 32
    %v1650 = vpop.permute.xlu0 %1649
    %v1652 = vadd.f32 %v1642, %v1650
    %v1653 = vtanh.pop %v1652
    %1655 = vrot.lane.b32.xlu0 %v1653, 64
    %v1656 = vpop.permute.xlu0 %1655
    %v1658 = vmul.f32 %v1641, %v1656
    %1660 = vrot.lane.b32.xlu0 %v1658, 32
    %v1661 = vpop.permute.xlu0 %1660
    %v1662 = vsel %vm1476, %v1661, 0
    %1664 = vmatpush.msra.mxu0 0.0
    %1665 = vmatpush.msra.mxu0 0.0
    %1666 = vmatpush.msra.mxu0 0.0
    %1667 = vmatpush.msra.mxu0 0.0
    %1668 = vmatpush.msra.mxu0 0.0
    %1669 = vmatpush.msra.mxu0 0.0
    %1670 = vmatpush.msra.mxu0 0.0
    %1671 = vmatpush.msra.mxu0 0.0
    %1672 = vmatpush.msra.mxu0 0.0
    %1673 = vmatpush.msra.mxu0 0.0
    %1674 = vmatpush.msra.mxu0 0.0
    %1675 = vmatpush.msra.mxu0 0.0
    %1676 = vmatpush.msra.mxu0 %v1475
    %1677 = vmatpush.msra.mxu0 %v1474
    %1678 = vmatpush.msra.mxu0 %v1473
    %1679 = vmatpush.msra.mxu0 %v1472
    %1680 = vmatmul.f32.gmra.mxu0 %v1662
    %v1681 = vpop.f32.mrf.mxu0
    %v1682 = vadd.f32 0.0, %v1681
    %1683 = vdwg.mxu0
    %v1684 = vadd.f32 %v1468, %v1682
    %v1685 = vtanh.pop %v1684
    %v1686 = vadd.f32 %v1685, 1.0
    %v1687 = vmul.f32 %v1686, 0.5
    %v1688 = vmul.f32 %v1687, %v1652
    %1690 = vrot.lane.b32.xlu0 %v1685, 64
    %v1691 = vpop.permute.xlu0 %1690
    %v1693 = vmul.f32 %v1687, %v1691
    %1695 = vrot.lane.b32.xlu0 %v1693, 32
    %v1696 = vpop.permute.xlu0 %1695
    %v1698 = vadd.f32 %v1688, %v1696
    %v1699 = vtanh.pop %v1698
    %1701 = vrot.lane.b32.xlu0 %v1699, 64
    %v1702 = vpop.permute.xlu0 %1701
    %v1704 = vmul.f32 %v1687, %v1702
    %1706 = vrot.lane.b32.xlu0 %v1704, 32
    %v1707 = vpop.permute.xlu0 %1706
    %v1708 = vsel %vm1476, %v1707, 0
    %1710 = vmatpush.msra.mxu0 0.0
    %1711 = vmatpush.msra.mxu0 0.0
    %1712 = vmatpush.msra.mxu0 0.0
    %1713 = vmatpush.msra.mxu0 0.0
    %1714 = vmatpush.msra.mxu0 0.0
    %1715 = vmatpush.msra.mxu0 0.0
    %1716 = vmatpush.msra.mxu0 0.0
    %1717 = vmatpush.msra.mxu0 0.0
    %1718 = vmatpush.msra.mxu0 0.0
    %1719 = vmatpush.msra.mxu0 0.0
    %1720 = vmatpush.msra.mxu0 0.0
    %1721 = vmatpush.msra.mxu0 0.0
    %1722 = vmatpush.msra.mxu0 %v1475
    %1723 = vmatpush.msra.mxu0 %v1474
    %1724 = vmatpush.msra.mxu0 %v1473
    %1725 = vmatpush.msra.mxu0 %v1472
    %1726 = vmatmul.f32.gmra.mxu0 %v1708
    %v1727 = vpop.f32.mrf.mxu0
    %v1728 = vadd.f32 0.0, %v1727
    %1729 = vdwg.mxu0
    %v1730 = vadd.f32 %v1469, %v1728
    %v1731 = vtanh.pop %v1730
    %v1732 = vadd.f32 %v1731, 1.0
    %v1733 = vmul.f32 %v1732, 0.5
    %v1734 = vmul.f32 %v1733, %v1698
    %1736 = vrot.lane.b32.xlu0 %v1731, 64
    %v1737 = vpop.permute.xlu0 %1736
    %v1739 = vmul.f32 %v1733, %v1737
    %1741 = vrot.lane.b32.xlu0 %v1739, 32
    %v1742 = vpop.permute.xlu0 %1741
    %v1744 = vadd.f32 %v1734, %v1742
    %v1745 = vtanh.pop %v1744
    %1747 = vrot.lane.b32.xlu0 %v1745, 64
    %v1748 = vpop.permute.xlu0 %1747
    %v1750 = vmul.f32 %v1733, %v1748
    %1752 = vrot.lane.b32.xlu0 %v1750, 32
    %v1753 = vpop.permute.xlu0 %1752
    %v1754 = vsel %vm1476, %v1753, 0
    %1756 = vmatpush.msra.mxu0 0.0
    %1757 = vmatpush.msra.mxu0 0.0
    %1758 = vmatpush.msra.mxu0 0.0
    %1759 = vmatpush.msra.mxu0 0.0
    %1760 = vmatpush.msra.mxu0 0.0
    %1761 = vmatpush.msra.mxu0 0.0
    %1762 = vmatpush.msra.mxu0 0.0
    %1763 = vmatpush.msra.mxu0 0.0
    %1764 = vmatpush.msra.mxu0 0.0
    %1765 = vmatpush.msra.mxu0 0.0
    %1766 = vmatpush.msra.mxu0 0.0
    %1767 = vmatpush.msra.mxu0 0.0
    %1768 = vmatpush.msra.mxu0 %v1475
    %1769 = vmatpush.msra.mxu0 %v1474
    %1770 = vmatpush.msra.mxu0 %v1473
    %1771 = vmatpush.msra.mxu0 %v1472
    %1772 = vmatmul.f32.gmra.mxu0 %v1754
    %v1773 = vpop.f32.mrf.mxu0
    %v1774 = vadd.f32 0.0, %v1773
    %1775 = vdwg.mxu0
    %v1776 = vadd.f32 %v1470, %v1774
    %v1777 = vtanh.pop %v1776
    %v1778 = vadd.f32 %v1777, 1.0
    %v1779 = vmul.f32 %v1778, 0.5
    %v1780 = vmul.f32 %v1779, %v1744
    %1782 = vrot.lane.b32.xlu0 %v1777, 64
    %v1783 = vpop.permute.xlu0 %1782
    %v1785 = vmul.f32 %v1779, %v1783
    %1787 = vrot.lane.b32.xlu0 %v1785, 32
    %v1788 = vpop.permute.xlu0 %1787
    %v1790 = vadd.f32 %v1780, %v1788
    %v1791 = vtanh.pop %v1790
    %1793 = vrot.lane.b32.xlu0 %v1791, 64
    %v1794 = vpop.permute.xlu0 %1793
    %v1796 = vmul.f32 %v1779, %v1794
    %1798 = vrot.lane.b32.xlu0 %v1796, 32
    %v1799 = vpop.permute.xlu0 %1798
    %v1800 = vsel %vm1476, %v1799, 0
    %1802 = vmatpush.msra.mxu0 0.0
    %1803 = vmatpush.msra.mxu0 0.0
    %1804 = vmatpush.msra.mxu0 0.0
    %1805 = vmatpush.msra.mxu0 0.0
    %1806 = vmatpush.msra.mxu0 0.0
    %1807 = vmatpush.msra.mxu0 0.0
    %1808 = vmatpush.msra.mxu0 0.0
    %1809 = vmatpush.msra.mxu0 0.0
    %1810 = vmatpush.msra.mxu0 0.0
    %1811 = vmatpush.msra.mxu0 0.0
    %1812 = vmatpush.msra.mxu0 0.0
    %1813 = vmatpush.msra.mxu0 0.0
    %1814 = vmatpush.msra.mxu0 %v1475
    %1815 = vmatpush.msra.mxu0 %v1474
    %1816 = vmatpush.msra.mxu0 %v1473
    %1817 = vmatpush.msra.mxu0 %v1472
    %1818 = vmatmul.f32.gmra.mxu0 %v1800
    %v1819 = vpop.f32.mrf.mxu0
    %v1820 = vadd.f32 0.0, %v1819
    %1821 = vdwg.mxu0
    %v1822 = vadd.f32 %v1471, %v1820
    %v1823 = vtanh.pop %v1822
    %v1824 = vadd.f32 %v1823, 1.0
    %v1825 = vmul.f32 %v1824, 0.5
    %v1826 = vmul.f32 %v1825, %v1790
    %1828 = vrot.lane.b32.xlu0 %v1823, 64
    %v1829 = vpop.permute.xlu0 %1828
    %v1831 = vmul.f32 %v1825, %v1829
    %1833 = vrot.lane.b32.xlu0 %v1831, 32
    %v1834 = vpop.permute.xlu0 %1833
    %v1836 = vadd.f32 %v1826, %v1834
    %v1837 = vtanh.pop %v1836
    %1839 = vrot.lane.b32.xlu0 %v1837, 64
    %v1840 = vpop.permute.xlu0 %1839
    %v1842 = vmul.f32 %v1825, %v1840
    %v1843 = vld [vmem:[#allocation2 + $0xb0] sm:$0xff]
    %v1844 = vld [vmem:[#allocation2 + $0xb8] sm:$0xff]
    %v1845 = vld [vmem:[#allocation2 + $0xc0] sm:$0xff]
    %v1846 = vld [vmem:[#allocation2 + $0xc8] sm:$0xff]
    %v1847 = vld [vmem:[#allocation2 + $0xe0] sm:$0x1]
    %v1848 = vperm.slane %v1847, 0
    %1850 = vrot.lane.b32.xlu0 %v1842, 32
    %v1851 = vpop.permute.xlu0 %1850
    %v1852 = vsel %vm1476, %v1851, 0
    %1854 = vmatpush.msra.mxu0 0.0
    %1855 = vmatpush.msra.mxu0 0.0
    %1856 = vmatpush.msra.mxu0 0.0
    %1857 = vmatpush.msra.mxu0 0.0
    %1858 = vmatpush.msra.mxu0 0.0
    %1859 = vmatpush.msra.mxu0 0.0
    %1860 = vmatpush.msra.mxu0 0.0
    %1861 = vmatpush.msra.mxu0 0.0
    %1862 = vmatpush.msra.mxu0 0.0
    %1863 = vmatpush.msra.mxu0 0.0
    %1864 = vmatpush.msra.mxu0 0.0
    %1865 = vmatpush.msra.mxu0 0.0
    %1866 = vmatpush.msra.mxu0 %v1846
    %1867 = vmatpush.msra.mxu0 %v1845
    %1868 = vmatpush.msra.mxu0 %v1844
    %1869 = vmatpush.msra.mxu0 %v1843
    %1870 = vmatmul.f32.gmra.mxu0 %v1852
    %v1871 = vpop.f32.mrf.mxu0
    %v1872 = vadd.f32 %v1848, %v1871
    %1873 = vdwg.mxu0
    %v1874 = vld [vmem:[#allocation2 + $0xe8] sm:$0x1]
    %v1875 = vld [vmem:[#allocation2 + $0xf0] sm:$0x1]
    %v1876 = vrot.slane %v1872, 4
    %v1877 = vadd.f32 %v1872, %v1876
    %v1878 = vrot.slane %v1877, 2
    %v1879 = vadd.f32 %v1877, %v1878
    %v1880 = vrot.slane %v1879, 1
    %v1881 = vadd.f32 %v1879, %v1880
    %v1882 = vrcp.pop 8.0
    %v1883 = vmul.f32 8.0, %v1882
    %v1884 = vsub.f32 1.0, %v1883
    %v1885 = vmul.f32 %v1882, %v1884
    %v1886 = vadd.f32 %v1882, %v1885
    %vm1887 = vweird.f32 %v1882
    %v1888 = vsel %vm1887, %v1882, %v1886
    %v1889 = vmul.f32 %v1881, %v1888
    %v1890 = vsub.f32 %v1872, %v1889
    %v1891 = vmul.f32 %v1890, %v1890
    %v1892 = vrot.slane %v1891, 4
    %v1893 = vadd.f32 %v1891, %v1892
    %v1894 = vrot.slane %v1893, 2
    %v1895 = vadd.f32 %v1893, %v1894
    %v1896 = vrot.slane %v1895, 1
    %v1897 = vadd.f32 %v1895, %v1896
    %v1898 = vmul.f32 %v1897, %v1888
    %v1899 = vadd.f32 %v1898, 1e-05
    %v1900 = vrsqrt.pop %v1899
    %v1901 = vmul.f32 %v1900, %v1899
    %v1902 = vmul.f32 %v1901, %v1900
    %v1903 = vmul.f32 0.5, %v1902
    %v1904 = vsub.f32 1.5, %v1903
    %v1905 = vmul.f32 %v1900, %v1904
    %vm1906 = vweird.f32 %v1899
    %vm1907 = vweird.f32 %v1900
    %vm1908 = vmor %vm1906, %vm1907
    %v1909 = vsel %vm1908, %v1900, %v1905
    %v1910 = vmul.f32 %v1890, %v1909
    %v1911 = vperm.slane %v1874, 0
    %v1912 = vmul.f32 %v1910, %v1911
    %v1913 = vperm.slane %v1875, 0
    %v1914 = vadd.f32 %v1912, %v1913
    %v1915 = vld [vmem:[#allocation4] sm:$0xff]
    %v1916 = vld [vmem:[#allocation4 + $0x8] sm:$0xff]
    %v1917 = vld [vmem:[#allocation4 + $0x10] sm:$0xff]
    %v1918 = vld [vmem:[#allocation4 + $0x18] sm:$0xff]
    %v1919 = vld [vmem:[#allocation4 + $0x20] sm:$0xff]
    %v1920 = vld [vmem:[#allocation4 + $0x28] sm:$0xff]
    %v1921 = vld [vmem:[#allocation4 + $0x30] sm:$0xff]
    %v1922 = vld [vmem:[#allocation4 + $0x38] sm:$0xff]
    %v1923 = vld [vmem:[#allocation4 + $0x40] sm:$0xff]
    %v1924 = vld [vmem:[#allocation4 + $0x48] sm:$0xff]
    %v1925 = vld [vmem:[#allocation4 + $0x50] sm:$0xff]
    %v1926 = vld [vmem:[#allocation4 + $0x58] sm:$0xff]
    %v1927 = vld [vmem:[#allocation4 + $0x60] sm:$0xff]
    %v1928 = vld [vmem:[#allocation4 + $0x68] sm:$0xff]
    %v1929 = vld [vmem:[#allocation4 + $0x70] sm:$0xff]
    %v1930 = vld [vmem:[#allocation4 + $0x78] sm:$0xff]
    %v1931 = vld [vmem:[#allocation4 + $0x80] sm:$0xff]
    %v1932 = vld [vmem:[#allocation4 + $0x88] sm:$0xff]
    %v1933 = vld [vmem:[#allocation4 + $0x90] sm:$0xff]
    %v1934 = vld [vmem:[#allocation4 + $0x98] sm:$0xff]
    %v1935 = vld [vmem:[#allocation4 + $0xa0] sm:$0xff]
    %v1936 = vld [vmem:[#allocation4 + $0xa8] sm:$0xff]
    %v1937 = vld [vmem:[#allocation4 + $0xb0] sm:$0xff]
    %v1938 = vld [vmem:[#allocation4 + $0xb8] sm:$0xff]
    %v1939 = vld [vmem:[#allocation4 + $0xc0] sm:$0xff]
    %v1940 = vld [vmem:[#allocation4 + $0xc8] sm:$0xff]
    %v1941 = vld [vmem:[#allocation4 + $0xd0] sm:$0xff]
    %v1942 = vld [vmem:[#allocation4 + $0xd8] sm:$0xff]
    %v1943 = vld [vmem:[#allocation4 + $0xe0] sm:$0xff]
    %v1944 = vld [vmem:[#allocation4 + $0xe8] sm:$0xff]
    %v1945 = vld [vmem:[#allocation4 + $0xf0] sm:$0xff]
    %v1946 = vld [vmem:[#allocation4 + $0xf8] sm:$0xff]
    %s1947 = scalar_lea.vmem [#allocation4], 256
    %v1948 = vld [vmem:[%s1947] ss:$8 sm:$0x3]
    %v1950 = vperm.slane %v1948, 0
    %v1951 = vperm.slane %v1948, 1
    %1954 = vmatpush.msra.mxu0 %v1945
    %1955 = vmatpush.msra.mxu0 %v1943
    %1956 = vmatpush.msra.mxu0 %v1941
    %1957 = vmatpush.msra.mxu0 %v1939
    %1958 = vmatpush.msra.mxu0 %v1937
    %1959 = vmatpush.msra.mxu0 %v1935
    %1960 = vmatpush.msra.mxu0 %v1933
    %1961 = vmatpush.msra.mxu0 %v1931
    %1962 = vmatpush.msra.mxu0 %v1929
    %1963 = vmatpush.msra.mxu0 %v1927
    %1964 = vmatpush.msra.mxu0 %v1925
    %1965 = vmatpush.msra.mxu0 %v1923
    %1966 = vmatpush.msra.mxu0 %v1921
    %1967 = vmatpush.msra.mxu0 %v1919
    %1968 = vmatpush.msra.mxu0 %v1917
    %1969 = vmatpush.msra.mxu0 %v1915
    %1970 = vmatmul.f32.gmra.mxu0 %v1914
    %v1971 = vpop.f32.mrf.mxu0
    %v1972 = vadd.f32 %v1950, %v1971
    %1973 = vdwg.mxu0
    %1974 = vmatpush.msra.mxu0 %v1946
    %1975 = vmatpush.msra.mxu0 %v1944
    %1976 = vmatpush.msra.mxu0 %v1942
    %1977 = vmatpush.msra.mxu0 %v1940
    %1978 = vmatpush.msra.mxu0 %v1938
    %1979 = vmatpush.msra.mxu0 %v1936
    %1980 = vmatpush.msra.mxu0 %v1934
    %1981 = vmatpush.msra.mxu0 %v1932
    %1982 = vmatpush.msra.mxu0 %v1930
    %1983 = vmatpush.msra.mxu0 %v1928
    %1984 = vmatpush.msra.mxu0 %v1926
    %1985 = vmatpush.msra.mxu0 %v1924
    %1986 = vmatpush.msra.mxu0 %v1922
    %1987 = vmatpush.msra.mxu0 %v1920
    %1988 = vmatpush.msra.mxu0 %v1918
    %1989 = vmatpush.msra.mxu0 %v1916
    %1990 = vmatmul.f32.gmra.mxu0 %v1914
    %v1991 = vpop.f32.mrf.mxu0
    %v1992 = vadd.f32 %v1951, %v1991
    %1993 = vdwg.mxu0
    %s1994 = scalar_lea.vmem [#allocation4], 272
    %v1995 = vld [vmem:[%s1994] ss:$8 sm:$0x3]
    %s1996 = scalar_lea.vmem [#allocation4], 288
    %v1997 = vld [vmem:[%s1996] ss:$8 sm:$0x3]
    %v1998 = vrot.slane %v1972, 4
    %v1999 = vadd.f32 %v1972, %v1998
    %v2000 = vrot.slane %v1999, 2
    %v2001 = vadd.f32 %v1999, %v2000
    %v2002 = vrot.slane %v2001, 1
    %v2003 = vadd.f32 %v2001, %v2002
    %v2004 = vrot.slane %v1992, 4
    %v2005 = vadd.f32 %v1992, %v2004
    %v2006 = vrot.slane %v2005, 2
    %v2007 = vadd.f32 %v2005, %v2006
    %v2008 = vrot.slane %v2007, 1
    %v2009 = vadd.f32 %v2007, %v2008
    %v2010 = vmul.f32 %v2003, %v1888
    %v2011 = vmul.f32 %v2009, %v1888
    %v2012 = vsub.f32 %v1972, %v2010
    %v2013 = vsub.f32 %v1992, %v2011
    %v2014 = vmul.f32 %v2012, %v2012
    %v2015 = vmul.f32 %v2013, %v2013
    %v2016 = vrot.slane %v2014, 4
    %v2017 = vadd.f32 %v2014, %v2016
    %v2018 = vrot.slane %v2017, 2
    %v2019 = vadd.f32 %v2017, %v2018
    %v2020 = vrot.slane %v2019, 1
    %v2021 = vadd.f32 %v2019, %v2020
    %v2022 = vrot.slane %v2015, 4
    %v2023 = vadd.f32 %v2015, %v2022
    %v2024 = vrot.slane %v2023, 2
    %v2025 = vadd.f32 %v2023, %v2024
    %v2026 = vrot.slane %v2025, 1
    %v2027 = vadd.f32 %v2025, %v2026
    %v2028 = vmul.f32 %v2021, %v1888
    %v2029 = vmul.f32 %v2027, %v1888
    %v2030 = vadd.f32 %v2028, 1e-05
    %v2031 = vadd.f32 %v2029, 1e-05
    %v2032 = vrsqrt.pop %v2030
    %v2033 = vmul.f32 %v2032, %v2030
    %v2034 = vmul.f32 %v2033, %v2032
    %v2035 = vmul.f32 0.5, %v2034
    %v2036 = vsub.f32 1.5, %v2035
    %v2037 = vmul.f32 %v2032, %v2036
    %vm2038 = vweird.f32 %v2030
    %vm2039 = vweird.f32 %v2032
    %vm2040 = vmor %vm2038, %vm2039
    %v2041 = vsel %vm2040, %v2032, %v2037
    %v2042 = vrsqrt.pop %v2031
    %v2043 = vmul.f32 %v2042, %v2031
    %v2044 = vmul.f32 %v2043, %v2042
    %v2045 = vmul.f32 0.5, %v2044
    %v2046 = vsub.f32 1.5, %v2045
    %v2047 = vmul.f32 %v2042, %v2046
    %vm2048 = vweird.f32 %v2031
    %vm2049 = vweird.f32 %v2042
    %vm2050 = vmor %vm2048, %vm2049
    %v2051 = vsel %vm2050, %v2042, %v2047
    %v2052 = vmul.f32 %v2012, %v2041
    %v2053 = vmul.f32 %v2013, %v2051
    %v2055 = vperm.slane %v1995, 0
    %v2056 = vperm.slane %v1995, 1
    %v2059 = vmul.f32 %v2052, %v2055
    %v2060 = vmul.f32 %v2053, %v2056
    %v2062 = vperm.slane %v1997, 0
    %v2063 = vperm.slane %v1997, 1
    %v2066 = vadd.f32 %v2059, %v2062
    %v2067 = vadd.f32 %v2060, %v2063
    %s2068 = scalar_lea.vmem [#allocation4], 304
    %v2069 = vld [vmem:[%s2068] ss:$8 sm:$0x3]
    %v2071 = vperm.slane %v2069, 0
    %v2072 = vperm.slane %v2069, 1
    %v2075 = vmul.f32 %v2066, %v2071
    %v2076 = vmul.f32 %v2067, %v2072
    %s2077 = scalar_lea.vmem [#allocation4], 320
    %v2078 = vld [vmem:[%s2077] ss:$8 sm:$0x3]
    %v2080 = vperm.slane %v2078, 0
    %v2081 = vperm.slane %v2078, 1
    %v2084 = vadd.f32 %v2075, %v2080
    %v2085 = vadd.f32 %v2076, %v2081
    %v2086 = vadd.f32 %v2084, %v2085
    %2087 = vadd.xlane.f32.xlu0 %v2086
    %v2088 = vpop.xlane.xlu0 %2087
    %vm2089 = vcmask 7168
    %2090 = vst.msk [vmem:[%s3] sm:$0xff] %vm2089, %v2088
    // Predicated region
    $region22: #{tpu_custom_call.1} parent=1 // pred_check
      _
    $region23: #{tpu_custom_call.1} parent=1 // pred_check_branch
      %2092 = sbr.rel (0) target = $region25
    $region24: #{tpu_custom_call.1} parent=1 // pred_region
      _
    $region25: #{tpu_custom_call.1} parent=1 // pred_fallthru
      _
    // Predicated region
    $region26: #{tpu_custom_call.1} parent=1 // pred_check
      _
    $region27: #{tpu_custom_call.1} parent=1 // pred_check_branch
      %2094 = sbr.rel (0) target = $region29
    $region28: #{tpu_custom_call.1} parent=1 // pred_region
      _
    $region29: #{tpu_custom_call.1} parent=1 // pred_fallthru
      _
    %2095 = vsyncpa [#allocation3], 1
    %2096 = vsyncpa [#allocation5], 1

</llo_original>
